<compile_context>
chip_gen: v7x
topology: tpu7x:2x2x1
jax: 0.10.0
libtpu: 0.0.40
codegen_flags: <defaults>
</compile_context>

<pallas_src>
import functools

import jax
import jax.numpy as jnp
from jax import lax
from jax.experimental import pallas as pl
from jax.experimental.pallas import tpu as pltpu


def _bilstm_dir_kernel(emb_ref, mask_ref, wih_ref, whh_ref, b_ref,     # inputs
                       pooled_ref,                                     # output
                       xg_ref, h_ref, c_ref, mx_ref, sm_ref,           # scratch
                       *, seq_len, chunk, batch_p, hidden, unroll):
    # emb_ref  : [TC*Bp, E] bf16  time-major chunk (fwd: chunk g, bwd: chunk NC-1-g)
    # mask_ref : [TC*Bp, 1] f32   matching (x != 0) mask chunk
    # wih_ref  : [E, 4H] bf16     this direction's input weights (i|f|g|o)
    # whh_ref  : [H, 4H] bf16     this direction's recurrent weights
    # b_ref    : [1, 4H] f32      b_ih + b_hh
    # pooled_ref: [Bp, 2H] f32    [max_pool | avg_pool] for this direction
    # xg_ref   : [TC*Bp, 4H] f32  per-chunk projected gates (scratch)
    d = pl.program_id(0)                 # 0 = forward, 1 = backward
    g = pl.program_id(1)                 # serial time-chunk index
    nc = pl.num_programs(1)
    H = hidden
    B = batch_p
    TC = chunk

    # ---- per-chunk input projection: one wide MXU matmul (bf16 in, f32 acc),
    # bias folded in.  The streamed emb/mask DMAs for the next chunk overlap
    # with the recurrence below. ----
    xg_ref[...] = (jnp.dot(emb_ref[...], wih_ref[...],
                           preferred_element_type=jnp.float32) + b_ref[...])

    # ---- recurrent state / pooling accumulators persist across time chunks;
    # re-initialised at the first chunk of each direction. ----
    @pl.when(g == 0)
    def _init():
        h_ref[...] = jnp.zeros_like(h_ref)
        c_ref[...] = jnp.zeros_like(c_ref)
        mx_ref[...] = jnp.full_like(mx_ref, -jnp.inf)
        sm_ref[...] = jnp.zeros_like(sm_ref)

    whh = whh_ref[...]                   # [H, 4H] bf16, resident across the loop

    def step(s, carry):
        h, c, mx, sm = carry
        # forward walks the chunk 0..TC-1, backward walks it TC-1..0
        sl = d * (TC - 1) + (1 - 2 * d) * s
        row = pl.multiple_of(sl * B, B)              # Bp-aligned sublane slice
        gates = xg_ref[pl.ds(row, B), :] + jnp.dot(
            h.astype(jnp.bfloat16), whh, preferred_element_type=jnp.float32)
        i_f = jax.nn.sigmoid(gates[:, :2 * H])       # i|f fused; skip g filler
        g_g = jnp.tanh(gates[:, 2 * H:3 * H])
        o_g = jax.nn.sigmoid(gates[:, 3 * H:])
        c = i_f[:, H:] * c + i_f[:, :H] * g_g
        h = o_g * jnp.tanh(c)
        hm = h * mask_ref[pl.ds(row, B), :]          # [Bp,H] * [Bp,1]
        return h, c, jnp.maximum(mx, hm), sm + hm

    h, c, mx, sm = lax.fori_loop(
        0, TC, step,
        (h_ref[...], c_ref[...], mx_ref[...], sm_ref[...]),
        unroll=unroll)

    h_ref[...] = h
    c_ref[...] = c
    mx_ref[...] = mx
    sm_ref[...] = sm

    @pl.when(g == nc - 1)
    def _emit():
        # torch mean pools over the full T (incl. padded steps) -> divide by T
        pooled_ref[...] = jnp.concatenate([mx, sm * (1.0 / seq_len)], axis=1)


def _fc_kernel(pooled_ref, w_ref, b_ref, out_ref):
    # pooled_ref: [2, Bp, 2H] f32 ([max_d | avg_d] per direction)
    # w_ref     : [2, 2H, Cp] f32 (rows permuted to match the pooled packing)
    acc = jnp.dot(pooled_ref[0], w_ref[0], preferred_element_type=jnp.float32)
    acc = acc + jnp.dot(pooled_ref[1], w_ref[1], preferred_element_type=jnp.float32)
    out_ref[...] = acc + b_ref[...]


def _pick_time_chunk(T, Bp, E, H, target):
    # Largest divisor of T (<= target) whose streamed footprint (2x emb bf16
    # blocks + 2x mask blocks + f32 gate scratch) fits a ~20 MiB budget, so the
    # kernel stays well inside 64 MiB VMEM on v7x at any sequence length.
    # TODO(synk): support a ragged final chunk so TC need not divide T.
    budget = 20 * 1024 * 1024
    per_step = Bp * (2 * E * 2 + 2 * 4 + 4 * H * 4)
    best = 1
    for tc in range(1, T + 1):
        if T % tc == 0 and tc <= target and tc * per_step <= budget:
            best = tc
    return best


def _pick_unroll(tc):
    for u in (8, 4, 2, 1):
        if tc % u == 0:
            return u
    return 1


def _vmem_estimate(TC, Bp, E, H):
    chunk = TC * Bp * (2 * E * 2 + 2 * 4 + 4 * H * 4)          # emb x2, mask x2, xg
    weights = 2 * (E * 4 * H * 2 + H * 4 * H * 2 + 4 * H * 4)
    state = 4 * Bp * H * 4 + 2 * Bp * 2 * H * 4
    est = chunk + weights + state
    return int(min(64 * 1024 * 1024, max(32 * 1024 * 1024, 2 * est)))


def bilstm_forward(x, params, *, time_chunk_target=256):
    """x: [B, T] int32 token ids (0 = padding). Returns logits [B, C]."""
    B, T = x.shape
    H = params["whh_pk"].shape[1]
    E = params["wih_pk"].shape[1]
    C = params["num_classes"]
    Cp = params["fc_w_pk"].shape[-1]

    # Pad batch to the f32 sublane tile so every per-step slice is aligned.
    Bp = max(8, ((B + 7) // 8) * 8)
    xp = jnp.zeros((Bp, T), x.dtype).at[:B].set(x)     # pad rows = token 0

    TC = _pick_time_chunk(T, Bp, E, H, time_chunk_target)
    NC = T // TC

    mask_2d = (xp != 0).astype(jnp.float32).T.reshape(T * Bp, 1)   # [T*Bp, 1]
    # Embedding gather stays as JAX glue (bf16 activations halve HBM traffic).
    # embedding_dropout / lstm_dropout are identity at inference.
    # TODO(synk): fuse the gather into the kernel (scalar-prefetch token ids +
    # DMA-gather rows from the HBM table) to avoid materialising emb_2d in HBM.
    emb_2d = params["embedding"][xp.T.reshape(-1)]                 # [T*Bp, E] bf16

    cmap = lambda d, g: ((1 - d) * g + d * (NC - 1 - g), 0)        # fwd / reversed chunks
    dmap = lambda d, g: (d, 0, 0)                                  # per-direction weights

    kern = functools.partial(
        _bilstm_dir_kernel, seq_len=T, chunk=TC, batch_p=Bp, hidden=H,
        unroll=_pick_unroll(TC))

    pooled = pl.pallas_call(
        kern,
        out_shape=jax.ShapeDtypeStruct((2, Bp, 2 * H), jnp.float32),
        grid_spec=pltpu.PrefetchScalarGridSpec(
            num_scalar_prefetch=0,
            grid=(2, NC),
            in_specs=[
                pl.BlockSpec((TC * Bp, E), cmap),                  # emb chunk
                pl.BlockSpec((TC * Bp, 1), cmap),                  # mask chunk
                pl.BlockSpec((None, E, 4 * H), dmap),              # wih (this dir)
                pl.BlockSpec((None, H, 4 * H), dmap),              # whh (this dir)
                pl.BlockSpec((None, 1, 4 * H), dmap),              # bias (this dir)
            ],
            out_specs=pl.BlockSpec((None, Bp, 2 * H), dmap),
            scratch_shapes=[
                pltpu.VMEM((TC * Bp, 4 * H), jnp.float32),         # chunk gates
                pltpu.VMEM((Bp, H), jnp.float32),                  # h
                pltpu.VMEM((Bp, H), jnp.float32),                  # c
                pltpu.VMEM((Bp, H), jnp.float32),                  # max pool
                pltpu.VMEM((Bp, H), jnp.float32),                  # sum pool
            ]),
        compiler_params=pltpu.CompilerParams(
            dimension_semantics=("parallel", "arbitrary"),
            vmem_limit_bytes=_vmem_estimate(TC, Bp, E, H)),
    )(emb_2d, mask_2d, params["wih_pk"], params["whh_pk"], params["b_pk"])

    vmem = pl.BlockSpec(memory_space=pltpu.MemorySpace.VMEM)
    logits_pad = pl.pallas_call(
        _fc_kernel,
        out_shape=jax.ShapeDtypeStruct((Bp, Cp), jnp.float32),
        in_specs=[vmem, vmem, vmem],
        out_specs=vmem,
    )(pooled, params["fc_w_pk"], params["fc_b_pad"])

    return logits_pad[:B, :C]


def make_params(key, vocab_size, embed_dim, hidden_dim, num_classes):
    """Deterministic synthetic parameters (nn.Module shapes), pre-packed into
    the per-direction, bf16 layout the kernels consume."""
    ks = jax.random.split(key, 11)
    H = hidden_dim
    kscale = 1.0 / jnp.sqrt(H)

    emb = 0.1 * jax.random.normal(ks[0], (vocab_size, embed_dim), jnp.float32)
    emb = emb.at[0].set(0.0)                               # padding_idx=0 row

    def lstm_dir(k_ih, k_hh, k_bih, k_bhh):
        # PyTorch layout: weight_ih [4H, E], weight_hh [4H, H], gates (i,f,g,o)
        w_ih = jax.random.uniform(k_ih, (4 * H, embed_dim), jnp.float32, -kscale, kscale)
        w_hh = jax.random.uniform(k_hh, (4 * H, H), jnp.float32, -kscale, kscale)
        b_ih = jax.random.uniform(k_bih, (4 * H,), jnp.float32, -kscale, kscale)
        b_hh = jax.random.uniform(k_bhh, (4 * H,), jnp.float32, -kscale, kscale)
        return w_ih.T, w_hh.T, b_ih + b_hh                 # [E,4H], [H,4H], [4H]

    wih_f, whh_f, b_f = lstm_dir(ks[1], ks[2], ks[3], ks[4])
    wih_b, whh_b, b_b = lstm_dir(ks[5], ks[6], ks[7], ks[8])

    # Per-direction stacking (de-fused Whh: no block-diagonal zeros, and the two
    # recurrent chains stay independent for latency overlap / megacore split).
    wih_pk = jnp.stack([wih_f, wih_b]).astype(jnp.bfloat16)        # [2, E, 4H]
    whh_pk = jnp.stack([whh_f, whh_b]).astype(jnp.bfloat16)        # [2, H, 4H]
    b_pk = jnp.stack([b_f, b_b])[:, None, :]                       # [2, 1, 4H] f32

    fc_w = 0.1 * jax.random.normal(ks[9], (num_classes, 4 * H), jnp.float32)
    fc_b = 0.1 * jax.random.normal(ks[10], (num_classes,), jnp.float32)
    Cp = 128 * ((num_classes + 127) // 128)                        # lane-dense output
    fcwT = fc_w.T                                                  # rows: [max_f|max_b|avg_f|avg_b]
    w0 = jnp.concatenate([fcwT[:H], fcwT[2 * H:3 * H]], axis=0)    # fwd rows [max_f|avg_f]
    w1 = jnp.concatenate([fcwT[H:2 * H], fcwT[3 * H:]], axis=0)    # bwd rows [max_b|avg_b]
    fc_w_pk = jnp.zeros((2, 2 * H, Cp), jnp.float32)
    fc_w_pk = fc_w_pk.at[0, :, :num_classes].set(w0).at[1, :, :num_classes].set(w1)
    fc_b_pad = jnp.zeros((1, Cp), jnp.float32).at[0, :num_classes].set(fc_b)

    return dict(embedding=emb.astype(jnp.bfloat16), wih_pk=wih_pk, whh_pk=whh_pk,
                b_pk=b_pk, fc_w_pk=fc_w_pk, fc_b_pad=fc_b_pad,
                num_classes=num_classes)


def ref_forward(x, params):
    """Pure-JAX reference mirroring the PyTorch forward (eval mode) and the
    kernel's bf16 weight / activation rounding."""
    B, T = x.shape
    H = params["whh_pk"].shape[1]
    C = params["num_classes"]
    mask = (x != 0).astype(jnp.float32)[:, :, None]
    emb = params["embedding"][x].astype(jnp.float32)       # bf16 values, f32 math

    def run(d, reverse):
        wih = params["wih_pk"][d].astype(jnp.float32)
        whh = params["whh_pk"][d].astype(jnp.float32)
        b = params["b_pk"][d]
        h = jnp.zeros((B, H), jnp.float32)
        c = jnp.zeros((B, H), jnp.float32)
        outs = [None] * T
        order = range(T - 1, -1, -1) if reverse else range(T)
        for t in order:
            hq = h.astype(jnp.bfloat16).astype(jnp.float32)  # mirror in-kernel cast
            g = emb[:, t, :] @ wih + hq @ whh + b
            i = jax.nn.sigmoid(g[:, :H])
            f = jax.nn.sigmoid(g[:, H:2 * H])
            gg = jnp.tanh(g[:, 2 * H:3 * H])
            o = jax.nn.sigmoid(g[:, 3 * H:])
            c = f * c + i * gg
            h = o * jnp.tanh(c)
            outs[t] = h
        return jnp.stack(outs, axis=1)

    out_f = run(0, False)
    out_b = run(1, True)
    lstm_out = jnp.concatenate([out_f, out_b], axis=-1) * mask
    pooled = jnp.concatenate(
        [jnp.max(lstm_out, axis=1), jnp.mean(lstm_out, axis=1)], axis=1)
    w0, w1 = params["fc_w_pk"][0], params["fc_w_pk"][1]
    fc_w = jnp.concatenate([w0[:H], w1[:H], w0[H:], w1[H:]], axis=0)  # [4H, Cp]
    logits = pooled @ fc_w + params["fc_b_pad"]
    return logits[:, :C]


if __name__ == "__main__":
    VOCAB, EMBED, HIDDEN, CLASSES = 50, 32, 32, 4
    B, T = 2, 8

    key = jax.random.PRNGKey(0)
    k_param, k_tok = jax.random.split(key)
    params = make_params(k_param, VOCAB, EMBED, HIDDEN, CLASSES)

    x = jax.random.randint(k_tok, (B, T), 1, VOCAB, dtype=jnp.int32)
    x = x.at[0, 6:].set(0)      # padding tokens to exercise the mask
    x = x.at[1, 4:].set(0)

    logits = bilstm_forward(x, params)
    jax.block_until_ready(logits)

    ref = ref_forward(x, params)
    assert logits.shape == (B, CLASSES)
    assert jnp.allclose(logits, ref, atol=2e-3, rtol=2e-3), (logits, ref)

    print("KERNEL_OK")
</pallas_src>

<mosaic_0001>
module attributes {stable_mosaic.version = 11 : i64} {
  func.func @_bilstm_dir_kernel(%arg0: i32, %arg1: i32, %arg2: memref<64x32xbf16, #tpu.memory_space<vmem>>, %arg3: memref<64x1xf32, #tpu.memory_space<vmem>>, %arg4: memref<1x32x128xbf16, #tpu.memory_space<vmem>>, %arg5: memref<1x32x128xbf16, #tpu.memory_space<vmem>>, %arg6: memref<1x1x128xf32, #tpu.memory_space<vmem>>, %arg7: memref<1x8x64xf32, #tpu.memory_space<vmem>>, %arg8: memref<64x128xf32, #tpu.memory_space<vmem>>, %arg9: memref<8x32xf32, #tpu.memory_space<vmem>>, %arg10: memref<8x32xf32, #tpu.memory_space<vmem>>, %arg11: memref<8x32xf32, #tpu.memory_space<vmem>>, %arg12: memref<8x32xf32, #tpu.memory_space<vmem>>) attributes {dimension_semantics = [#tpu.dimension_semantics<parallel>, #tpu.dimension_semantics<arbitrary>], iteration_bounds = array<i64: 2, 1>, scalar_prefetch = 0 : i64, scratch_operands = 5 : i64, tpu.core_type = #tpu.core_type<tc>, window_params = [{transform_indices = @transform_0, window_bounds = array<i64: 64, 32>}, {transform_indices = @transform_1, window_bounds = array<i64: 64, 1>}, {transform_indices = @transform_2, window_bounds = array<i64: 1, 32, 128>}, {transform_indices = @transform_3, window_bounds = array<i64: 1, 32, 128>}, {transform_indices = @transform_4, window_bounds = array<i64: 1, 1, 128>}, {transform_indices = @transform_5, window_bounds = array<i64: 1, 8, 64>}]} {
    %c0 = arith.constant 0 : index
    %c0_0 = arith.constant 0 : index
    %0 = vector.load %arg2[%c0, %c0_0] : memref<64x32xbf16, #tpu.memory_space<vmem>>, vector<64x32xbf16>
    %c0_1 = arith.constant 0 : index
    %c0_2 = arith.constant 0 : index
    %c0_3 = arith.constant 0 : index
    %1 = vector.load %arg4[%c0_1, %c0_2, %c0_3] : memref<1x32x128xbf16, #tpu.memory_space<vmem>>, vector<1x32x128xbf16>
    %2 = vector.shape_cast %1 : vector<1x32x128xbf16> to vector<32x128xbf16>
    %cst = arith.constant dense<0.000000e+00> : vector<64x128xf32>
    %3 = tpu.matmul %0, %2, %cst {dimension_numbers = #tpu.dot_dimension_numbers<[1], [0], [0], [1], [0, 0, 1, 1], [], []>} : vector<64x32xbf16>, vector<32x128xbf16>, vector<64x128xf32> -> vector<64x128xf32>
    %c0_4 = arith.constant 0 : index
    %c0_5 = arith.constant 0 : index
    %c0_6 = arith.constant 0 : index
    %4 = vector.load %arg6[%c0_4, %c0_5, %c0_6] : memref<1x1x128xf32, #tpu.memory_space<vmem>>, vector<1x1x128xf32>
    %5 = vector.shape_cast %4 : vector<1x1x128xf32> to vector<1x128xf32>
    %6 = vector.broadcast %5 : vector<1x128xf32> to vector<64x128xf32>
    %7 = arith.addf %3, %6 : vector<64x128xf32>
    %c0_7 = arith.constant 0 : index
    %c0_8 = arith.constant 0 : index
    %8 = vector.load %arg8[%c0_7, %c0_8] : memref<64x128xf32, #tpu.memory_space<vmem>>, vector<64x128xf32>
    tpu.vector_store %arg8[%c0_7, %c0_8], %7 {strides = array<i32>} : memref<64x128xf32, #tpu.memory_space<vmem>>, vector<64x128xf32>,
    %c0_i32 = arith.constant 0 : i32
    %9 = arith.cmpi eq, %arg1, %c0_i32 : i32
    %10 = arith.extui %9 : i1 to i32
    %c0_i32_9 = arith.constant 0 : i32
    %11 = arith.cmpi ne, %10, %c0_i32_9 : i32
    scf.if %11 {
      %cst_104 = arith.constant 0.000000e+00 : f32
      %337 = vector.broadcast %cst_104 : f32 to vector<8x32xf32>
      %c0_105 = arith.constant 0 : index
      %c0_106 = arith.constant 0 : index
      %338 = vector.load %arg9[%c0_105, %c0_106] : memref<8x32xf32, #tpu.memory_space<vmem>>, vector<8x32xf32>
      tpu.vector_store %arg9[%c0_105, %c0_106], %337 {strides = array<i32>} : memref<8x32xf32, #tpu.memory_space<vmem>>, vector<8x32xf32>,
      %cst_107 = arith.constant 0.000000e+00 : f32
      %339 = vector.broadcast %cst_107 : f32 to vector<8x32xf32>
      %c0_108 = arith.constant 0 : index
      %c0_109 = arith.constant 0 : index
      %340 = vector.load %arg10[%c0_108, %c0_109] : memref<8x32xf32, #tpu.memory_space<vmem>>, vector<8x32xf32>
      tpu.vector_store %arg10[%c0_108, %c0_109], %339 {strides = array<i32>} : memref<8x32xf32, #tpu.memory_space<vmem>>, vector<8x32xf32>,
      %cst_110 = arith.constant 0xFF800000 : f32
      %341 = vector.broadcast %cst_110 : f32 to vector<8x32xf32>
      %c0_111 = arith.constant 0 : index
      %c0_112 = arith.constant 0 : index
      %342 = vector.load %arg11[%c0_111, %c0_112] : memref<8x32xf32, #tpu.memory_space<vmem>>, vector<8x32xf32>
      tpu.vector_store %arg11[%c0_111, %c0_112], %341 {strides = array<i32>} : memref<8x32xf32, #tpu.memory_space<vmem>>, vector<8x32xf32>,
      %cst_113 = arith.constant 0.000000e+00 : f32
      %343 = vector.broadcast %cst_113 : f32 to vector<8x32xf32>
      %c0_114 = arith.constant 0 : index
      %c0_115 = arith.constant 0 : index
      %344 = vector.load %arg12[%c0_114, %c0_115] : memref<8x32xf32, #tpu.memory_space<vmem>>, vector<8x32xf32>
      tpu.vector_store %arg12[%c0_114, %c0_115], %343 {strides = array<i32>} : memref<8x32xf32, #tpu.memory_space<vmem>>, vector<8x32xf32>,
    } else {
    }
    %c0_10 = arith.constant 0 : index
    %c0_11 = arith.constant 0 : index
    %c0_12 = arith.constant 0 : index
    %12 = vector.load %arg5[%c0_10, %c0_11, %c0_12] : memref<1x32x128xbf16, #tpu.memory_space<vmem>>, vector<1x32x128xbf16>
    %13 = vector.shape_cast %12 : vector<1x32x128xbf16> to vector<32x128xbf16>
    %c0_13 = arith.constant 0 : index
    %c0_14 = arith.constant 0 : index
    %14 = vector.load %arg9[%c0_13, %c0_14] : memref<8x32xf32, #tpu.memory_space<vmem>>, vector<8x32xf32>
    %c0_15 = arith.constant 0 : index
    %c0_16 = arith.constant 0 : index
    %15 = vector.load %arg10[%c0_15, %c0_16] : memref<8x32xf32, #tpu.memory_space<vmem>>, vector<8x32xf32>
    %c0_17 = arith.constant 0 : index
    %c0_18 = arith.constant 0 : index
    %16 = vector.load %arg11[%c0_17, %c0_18] : memref<8x32xf32, #tpu.memory_space<vmem>>, vector<8x32xf32>
    %c0_19 = arith.constant 0 : index
    %c0_20 = arith.constant 0 : index
    %17 = vector.load %arg12[%c0_19, %c0_20] : memref<8x32xf32, #tpu.memory_space<vmem>>, vector<8x32xf32>
    %c0_i32_21 = arith.constant 0 : i32
    %c7_i32 = arith.constant 7 : i32
    %18 = arith.muli %arg0, %c7_i32 : i32
    %c2_i32 = arith.constant 2 : i32
    %19 = arith.muli %c2_i32, %arg0 : i32
    %c1_i32 = arith.constant 1 : i32
    %20 = arith.subi %c1_i32, %19 : i32
    %21 = arith.muli %20, %c0_i32_21 : i32
    %22 = arith.addi %18, %21 : i32
    %c8_i32 = arith.constant 8 : i32
    %23 = arith.muli %22, %c8_i32 : i32
    %24 = tpu.assume_multiple %23, 8 : i32
    %25 = arith.index_cast %24 : i32 to index
    %c0_22 = arith.constant 0 : index
    %26 = vector.load %arg8[%25, %c0_22] : memref<64x128xf32, #tpu.memory_space<vmem>>, vector<8x128xf32>
    %27 = arith.truncf %14 : vector<8x32xf32> to vector<8x32xbf16>
    %cst_23 = arith.constant dense<0.000000e+00> : vector<8x128xf32>
    %28 = tpu.matmul %27, %13, %cst_23 {dimension_numbers = #tpu.dot_dimension_numbers<[1], [0], [0], [1], [0, 0, 1, 1], [], []>} : vector<8x32xbf16>, vector<32x128xbf16>, vector<8x128xf32> -> vector<8x128xf32>
    %29 = arith.addf %26, %28 : vector<8x128xf32>
    %30 = vector.extract_strided_slice %29 {offsets = [0, 0], sizes = [8, 64], strides = [1, 1]} : vector<8x128xf32> to vector<8x64xf32>
    %31 = arith.negf %30 : vector<8x64xf32>
    %32 = math.exp %31 : vector<8x64xf32>
    %cst_24 = arith.constant 1.000000e+00 : f32
    %33 = vector.broadcast %cst_24 : f32 to vector<8x64xf32>
    %34 = arith.addf %33, %32 : vector<8x64xf32>
    %35 = arith.divf %33, %34 : vector<8x64xf32>
    %36 = vector.extract_strided_slice %29 {offsets = [0, 64], sizes = [8, 32], strides = [1, 1]} : vector<8x128xf32> to vector<8x32xf32>
    %37 = math.tanh %36 : vector<8x32xf32>
    %38 = vector.extract_strided_slice %29 {offsets = [0, 96], sizes = [8, 32], strides = [1, 1]} : vector<8x128xf32> to vector<8x32xf32>
    %39 = arith.negf %38 : vector<8x32xf32>
    %40 = math.exp %39 : vector<8x32xf32>
    %cst_25 = arith.constant 1.000000e+00 : f32
    %41 = vector.broadcast %cst_25 : f32 to vector<8x32xf32>
    %42 = arith.addf %41, %40 : vector<8x32xf32>
    %43 = arith.divf %41, %42 : vector<8x32xf32>
    %44 = vector.extract_strided_slice %35 {offsets = [0, 32], sizes = [8, 32], strides = [1, 1]} : vector<8x64xf32> to vector<8x32xf32>
    %45 = arith.mulf %44, %15 : vector<8x32xf32>
    %46 = vector.extract_strided_slice %35 {offsets = [0, 0], sizes = [8, 32], strides = [1, 1]} : vector<8x64xf32> to vector<8x32xf32>
    %47 = arith.mulf %46, %37 : vector<8x32xf32>
    %48 = arith.addf %45, %47 : vector<8x32xf32>
    %49 = math.tanh %48 : vector<8x32xf32>
    %50 = arith.mulf %43, %49 : vector<8x32xf32>
    %51 = arith.index_cast %24 : i32 to index
    %c0_26 = arith.constant 0 : index
    %52 = vector.load %arg3[%51, %c0_26] : memref<64x1xf32, #tpu.memory_space<vmem>>, vector<8x1xf32>
    %53 = vector.broadcast %52 : vector<8x1xf32> to vector<8x32xf32>
    %54 = arith.mulf %50, %53 : vector<8x32xf32>
    %55 = arith.maximumf %16, %54 : vector<8x32xf32>
    %56 = arith.addf %17, %54 : vector<8x32xf32>
    %c1_i32_27 = arith.constant 1 : i32
    %c7_i32_28 = arith.constant 7 : i32
    %57 = arith.muli %arg0, %c7_i32_28 : i32
    %c2_i32_29 = arith.constant 2 : i32
    %58 = arith.muli %c2_i32_29, %arg0 : i32
    %c1_i32_30 = arith.constant 1 : i32
    %59 = arith.subi %c1_i32_30, %58 : i32
    %60 = arith.muli %59, %c1_i32_27 : i32
    %61 = arith.addi %57, %60 : i32
    %c8_i32_31 = arith.constant 8 : i32
    %62 = arith.muli %61, %c8_i32_31 : i32
    %63 = tpu.assume_multiple %62, 8 : i32
    %64 = arith.index_cast %63 : i32 to index
    %c0_32 = arith.constant 0 : index
    %65 = vector.load %arg8[%64, %c0_32] : memref<64x128xf32, #tpu.memory_space<vmem>>, vector<8x128xf32>
    %66 = arith.truncf %50 : vector<8x32xf32> to vector<8x32xbf16>
    %cst_33 = arith.constant dense<0.000000e+00> : vector<8x128xf32>
    %67 = tpu.matmul %66, %13, %cst_33 {dimension_numbers = #tpu.dot_dimension_numbers<[1], [0], [0], [1], [0, 0, 1, 1], [], []>} : vector<8x32xbf16>, vector<32x128xbf16>, vector<8x128xf32> -> vector<8x128xf32>
    %68 = arith.addf %65, %67 : vector<8x128xf32>
    %69 = vector.extract_strided_slice %68 {offsets = [0, 0], sizes = [8, 64], strides = [1, 1]} : vector<8x128xf32> to vector<8x64xf32>
    %70 = arith.negf %69 : vector<8x64xf32>
    %71 = math.exp %70 : vector<8x64xf32>
    %cst_34 = arith.constant 1.000000e+00 : f32
    %72 = vector.broadcast %cst_34 : f32 to vector<8x64xf32>
    %73 = arith.addf %72, %71 : vector<8x64xf32>
    %74 = arith.divf %72, %73 : vector<8x64xf32>
    %75 = vector.extract_strided_slice %68 {offsets = [0, 64], sizes = [8, 32], strides = [1, 1]} : vector<8x128xf32> to vector<8x32xf32>
    %76 = math.tanh %75 : vector<8x32xf32>
    %77 = vector.extract_strided_slice %68 {offsets = [0, 96], sizes = [8, 32], strides = [1, 1]} : vector<8x128xf32> to vector<8x32xf32>
    %78 = arith.negf %77 : vector<8x32xf32>
    %79 = math.exp %78 : vector<8x32xf32>
    %cst_35 = arith.constant 1.000000e+00 : f32
    %80 = vector.broadcast %cst_35 : f32 to vector<8x32xf32>
    %81 = arith.addf %80, %79 : vector<8x32xf32>
    %82 = arith.divf %80, %81 : vector<8x32xf32>
    %83 = vector.extract_strided_slice %74 {offsets = [0, 32], sizes = [8, 32], strides = [1, 1]} : vector<8x64xf32> to vector<8x32xf32>
    %84 = arith.mulf %83, %48 : vector<8x32xf32>
    %85 = vector.extract_strided_slice %74 {offsets = [0, 0], sizes = [8, 32], strides = [1, 1]} : vector<8x64xf32> to vector<8x32xf32>
    %86 = arith.mulf %85, %76 : vector<8x32xf32>
    %87 = arith.addf %84, %86 : vector<8x32xf32>
    %88 = math.tanh %87 : vector<8x32xf32>
    %89 = arith.mulf %82, %88 : vector<8x32xf32>
    %90 = arith.index_cast %63 : i32 to index
    %c0_36 = arith.constant 0 : index
    %91 = vector.load %arg3[%90, %c0_36] : memref<64x1xf32, #tpu.memory_space<vmem>>, vector<8x1xf32>
    %92 = vector.broadcast %91 : vector<8x1xf32> to vector<8x32xf32>
    %93 = arith.mulf %89, %92 : vector<8x32xf32>
    %94 = arith.maximumf %55, %93 : vector<8x32xf32>
    %95 = arith.addf %56, %93 : vector<8x32xf32>
    %c2_i32_37 = arith.constant 2 : i32
    %c7_i32_38 = arith.constant 7 : i32
    %96 = arith.muli %arg0, %c7_i32_38 : i32
    %c2_i32_39 = arith.constant 2 : i32
    %97 = arith.muli %c2_i32_39, %arg0 : i32
    %c1_i32_40 = arith.constant 1 : i32
    %98 = arith.subi %c1_i32_40, %97 : i32
    %99 = arith.muli %98, %c2_i32_37 : i32
    %100 = arith.addi %96, %99 : i32
    %c8_i32_41 = arith.constant 8 : i32
    %101 = arith.muli %100, %c8_i32_41 : i32
    %102 = tpu.assume_multiple %101, 8 : i32
    %103 = arith.index_cast %102 : i32 to index
    %c0_42 = arith.constant 0 : index
    %104 = vector.load %arg8[%103, %c0_42] : memref<64x128xf32, #tpu.memory_space<vmem>>, vector<8x128xf32>
    %105 = arith.truncf %89 : vector<8x32xf32> to vector<8x32xbf16>
    %cst_43 = arith.constant dense<0.000000e+00> : vector<8x128xf32>
    %106 = tpu.matmul %105, %13, %cst_43 {dimension_numbers = #tpu.dot_dimension_numbers<[1], [0], [0], [1], [0, 0, 1, 1], [], []>} : vector<8x32xbf16>, vector<32x128xbf16>, vector<8x128xf32> -> vector<8x128xf32>
    %107 = arith.addf %104, %106 : vector<8x128xf32>
    %108 = vector.extract_strided_slice %107 {offsets = [0, 0], sizes = [8, 64], strides = [1, 1]} : vector<8x128xf32> to vector<8x64xf32>
    %109 = arith.negf %108 : vector<8x64xf32>
    %110 = math.exp %109 : vector<8x64xf32>
    %cst_44 = arith.constant 1.000000e+00 : f32
    %111 = vector.broadcast %cst_44 : f32 to vector<8x64xf32>
    %112 = arith.addf %111, %110 : vector<8x64xf32>
    %113 = arith.divf %111, %112 : vector<8x64xf32>
    %114 = vector.extract_strided_slice %107 {offsets = [0, 64], sizes = [8, 32], strides = [1, 1]} : vector<8x128xf32> to vector<8x32xf32>
    %115 = math.tanh %114 : vector<8x32xf32>
    %116 = vector.extract_strided_slice %107 {offsets = [0, 96], sizes = [8, 32], strides = [1, 1]} : vector<8x128xf32> to vector<8x32xf32>
    %117 = arith.negf %116 : vector<8x32xf32>
    %118 = math.exp %117 : vector<8x32xf32>
    %cst_45 = arith.constant 1.000000e+00 : f32
    %119 = vector.broadcast %cst_45 : f32 to vector<8x32xf32>
    %120 = arith.addf %119, %118 : vector<8x32xf32>
    %121 = arith.divf %119, %120 : vector<8x32xf32>
    %122 = vector.extract_strided_slice %113 {offsets = [0, 32], sizes = [8, 32], strides = [1, 1]} : vector<8x64xf32> to vector<8x32xf32>
    %123 = arith.mulf %122, %87 : vector<8x32xf32>
    %124 = vector.extract_strided_slice %113 {offsets = [0, 0], sizes = [8, 32], strides = [1, 1]} : vector<8x64xf32> to vector<8x32xf32>
    %125 = arith.mulf %124, %115 : vector<8x32xf32>
    %126 = arith.addf %123, %125 : vector<8x32xf32>
    %127 = math.tanh %126 : vector<8x32xf32>
    %128 = arith.mulf %121, %127 : vector<8x32xf32>
    %129 = arith.index_cast %102 : i32 to index
    %c0_46 = arith.constant 0 : index
    %130 = vector.load %arg3[%129, %c0_46] : memref<64x1xf32, #tpu.memory_space<vmem>>, vector<8x1xf32>
    %131 = vector.broadcast %130 : vector<8x1xf32> to vector<8x32xf32>
    %132 = arith.mulf %128, %131 : vector<8x32xf32>
    %133 = arith.maximumf %94, %132 : vector<8x32xf32>
    %134 = arith.addf %95, %132 : vector<8x32xf32>
    %c3_i32 = arith.constant 3 : i32
    %c7_i32_47 = arith.constant 7 : i32
    %135 = arith.muli %arg0, %c7_i32_47 : i32
    %c2_i32_48 = arith.constant 2 : i32
    %136 = arith.muli %c2_i32_48, %arg0 : i32
    %c1_i32_49 = arith.constant 1 : i32
    %137 = arith.subi %c1_i32_49, %136 : i32
    %138 = arith.muli %137, %c3_i32 : i32
    %139 = arith.addi %135, %138 : i32
    %c8_i32_50 = arith.constant 8 : i32
    %140 = arith.muli %139, %c8_i32_50 : i32
    %141 = tpu.assume_multiple %140, 8 : i32
    %142 = arith.index_cast %141 : i32 to index
    %c0_51 = arith.constant 0 : index
    %143 = vector.load %arg8[%142, %c0_51] : memref<64x128xf32, #tpu.memory_space<vmem>>, vector<8x128xf32>
    %144 = arith.truncf %128 : vector<8x32xf32> to vector<8x32xbf16>
    %cst_52 = arith.constant dense<0.000000e+00> : vector<8x128xf32>
    %145 = tpu.matmul %144, %13, %cst_52 {dimension_numbers = #tpu.dot_dimension_numbers<[1], [0], [0], [1], [0, 0, 1, 1], [], []>} : vector<8x32xbf16>, vector<32x128xbf16>, vector<8x128xf32> -> vector<8x128xf32>
    %146 = arith.addf %143, %145 : vector<8x128xf32>
    %147 = vector.extract_strided_slice %146 {offsets = [0, 0], sizes = [8, 64], strides = [1, 1]} : vector<8x128xf32> to vector<8x64xf32>
    %148 = arith.negf %147 : vector<8x64xf32>
    %149 = math.exp %148 : vector<8x64xf32>
    %cst_53 = arith.constant 1.000000e+00 : f32
    %150 = vector.broadcast %cst_53 : f32 to vector<8x64xf32>
    %151 = arith.addf %150, %149 : vector<8x64xf32>
    %152 = arith.divf %150, %151 : vector<8x64xf32>
    %153 = vector.extract_strided_slice %146 {offsets = [0, 64], sizes = [8, 32], strides = [1, 1]} : vector<8x128xf32> to vector<8x32xf32>
    %154 = math.tanh %153 : vector<8x32xf32>
    %155 = vector.extract_strided_slice %146 {offsets = [0, 96], sizes = [8, 32], strides = [1, 1]} : vector<8x128xf32> to vector<8x32xf32>
    %156 = arith.negf %155 : vector<8x32xf32>
    %157 = math.exp %156 : vector<8x32xf32>
    %cst_54 = arith.constant 1.000000e+00 : f32
    %158 = vector.broadcast %cst_54 : f32 to vector<8x32xf32>
    %159 = arith.addf %158, %157 : vector<8x32xf32>
    %160 = arith.divf %158, %159 : vector<8x32xf32>
    %161 = vector.extract_strided_slice %152 {offsets = [0, 32], sizes = [8, 32], strides = [1, 1]} : vector<8x64xf32> to vector<8x32xf32>
    %162 = arith.mulf %161, %126 : vector<8x32xf32>
    %163 = vector.extract_strided_slice %152 {offsets = [0, 0], sizes = [8, 32], strides = [1, 1]} : vector<8x64xf32> to vector<8x32xf32>
    %164 = arith.mulf %163, %154 : vector<8x32xf32>
    %165 = arith.addf %162, %164 : vector<8x32xf32>
    %166 = math.tanh %165 : vector<8x32xf32>
    %167 = arith.mulf %160, %166 : vector<8x32xf32>
    %168 = arith.index_cast %141 : i32 to index
    %c0_55 = arith.constant 0 : index
    %169 = vector.load %arg3[%168, %c0_55] : memref<64x1xf32, #tpu.memory_space<vmem>>, vector<8x1xf32>
    %170 = vector.broadcast %169 : vector<8x1xf32> to vector<8x32xf32>
    %171 = arith.mulf %167, %170 : vector<8x32xf32>
    %172 = arith.maximumf %133, %171 : vector<8x32xf32>
    %173 = arith.addf %134, %171 : vector<8x32xf32>
    %c4_i32 = arith.constant 4 : i32
    %c7_i32_56 = arith.constant 7 : i32
    %174 = arith.muli %arg0, %c7_i32_56 : i32
    %c2_i32_57 = arith.constant 2 : i32
    %175 = arith.muli %c2_i32_57, %arg0 : i32
    %c1_i32_58 = arith.constant 1 : i32
    %176 = arith.subi %c1_i32_58, %175 : i32
    %177 = arith.muli %176, %c4_i32 : i32
    %178 = arith.addi %174, %177 : i32
    %c8_i32_59 = arith.constant 8 : i32
    %179 = arith.muli %178, %c8_i32_59 : i32
    %180 = tpu.assume_multiple %179, 8 : i32
    %181 = arith.index_cast %180 : i32 to index
    %c0_60 = arith.constant 0 : index
    %182 = vector.load %arg8[%181, %c0_60] : memref<64x128xf32, #tpu.memory_space<vmem>>, vector<8x128xf32>
    %183 = arith.truncf %167 : vector<8x32xf32> to vector<8x32xbf16>
    %cst_61 = arith.constant dense<0.000000e+00> : vector<8x128xf32>
    %184 = tpu.matmul %183, %13, %cst_61 {dimension_numbers = #tpu.dot_dimension_numbers<[1], [0], [0], [1], [0, 0, 1, 1], [], []>} : vector<8x32xbf16>, vector<32x128xbf16>, vector<8x128xf32> -> vector<8x128xf32>
    %185 = arith.addf %182, %184 : vector<8x128xf32>
    %186 = vector.extract_strided_slice %185 {offsets = [0, 0], sizes = [8, 64], strides = [1, 1]} : vector<8x128xf32> to vector<8x64xf32>
    %187 = arith.negf %186 : vector<8x64xf32>
    %188 = math.exp %187 : vector<8x64xf32>
    %cst_62 = arith.constant 1.000000e+00 : f32
    %189 = vector.broadcast %cst_62 : f32 to vector<8x64xf32>
    %190 = arith.addf %189, %188 : vector<8x64xf32>
    %191 = arith.divf %189, %190 : vector<8x64xf32>
    %192 = vector.extract_strided_slice %185 {offsets = [0, 64], sizes = [8, 32], strides = [1, 1]} : vector<8x128xf32> to vector<8x32xf32>
    %193 = math.tanh %192 : vector<8x32xf32>
    %194 = vector.extract_strided_slice %185 {offsets = [0, 96], sizes = [8, 32], strides = [1, 1]} : vector<8x128xf32> to vector<8x32xf32>
    %195 = arith.negf %194 : vector<8x32xf32>
    %196 = math.exp %195 : vector<8x32xf32>
    %cst_63 = arith.constant 1.000000e+00 : f32
    %197 = vector.broadcast %cst_63 : f32 to vector<8x32xf32>
    %198 = arith.addf %197, %196 : vector<8x32xf32>
    %199 = arith.divf %197, %198 : vector<8x32xf32>
    %200 = vector.extract_strided_slice %191 {offsets = [0, 32], sizes = [8, 32], strides = [1, 1]} : vector<8x64xf32> to vector<8x32xf32>
    %201 = arith.mulf %200, %165 : vector<8x32xf32>
    %202 = vector.extract_strided_slice %191 {offsets = [0, 0], sizes = [8, 32], strides = [1, 1]} : vector<8x64xf32> to vector<8x32xf32>
    %203 = arith.mulf %202, %193 : vector<8x32xf32>
    %204 = arith.addf %201, %203 : vector<8x32xf32>
    %205 = math.tanh %204 : vector<8x32xf32>
    %206 = arith.mulf %199, %205 : vector<8x32xf32>
    %207 = arith.index_cast %180 : i32 to index
    %c0_64 = arith.constant 0 : index
    %208 = vector.load %arg3[%207, %c0_64] : memref<64x1xf32, #tpu.memory_space<vmem>>, vector<8x1xf32>
    %209 = vector.broadcast %208 : vector<8x1xf32> to vector<8x32xf32>
    %210 = arith.mulf %206, %209 : vector<8x32xf32>
    %211 = arith.maximumf %172, %210 : vector<8x32xf32>
    %212 = arith.addf %173, %210 : vector<8x32xf32>
    %c5_i32 = arith.constant 5 : i32
    %c7_i32_65 = arith.constant 7 : i32
    %213 = arith.muli %arg0, %c7_i32_65 : i32
    %c2_i32_66 = arith.constant 2 : i32
    %214 = arith.muli %c2_i32_66, %arg0 : i32
    %c1_i32_67 = arith.constant 1 : i32
    %215 = arith.subi %c1_i32_67, %214 : i32
    %216 = arith.muli %215, %c5_i32 : i32
    %217 = arith.addi %213, %216 : i32
    %c8_i32_68 = arith.constant 8 : i32
    %218 = arith.muli %217, %c8_i32_68 : i32
    %219 = tpu.assume_multiple %218, 8 : i32
    %220 = arith.index_cast %219 : i32 to index
    %c0_69 = arith.constant 0 : index
    %221 = vector.load %arg8[%220, %c0_69] : memref<64x128xf32, #tpu.memory_space<vmem>>, vector<8x128xf32>
    %222 = arith.truncf %206 : vector<8x32xf32> to vector<8x32xbf16>
    %cst_70 = arith.constant dense<0.000000e+00> : vector<8x128xf32>
    %223 = tpu.matmul %222, %13, %cst_70 {dimension_numbers = #tpu.dot_dimension_numbers<[1], [0], [0], [1], [0, 0, 1, 1], [], []>} : vector<8x32xbf16>, vector<32x128xbf16>, vector<8x128xf32> -> vector<8x128xf32>
    %224 = arith.addf %221, %223 : vector<8x128xf32>
    %225 = vector.extract_strided_slice %224 {offsets = [0, 0], sizes = [8, 64], strides = [1, 1]} : vector<8x128xf32> to vector<8x64xf32>
    %226 = arith.negf %225 : vector<8x64xf32>
    %227 = math.exp %226 : vector<8x64xf32>
    %cst_71 = arith.constant 1.000000e+00 : f32
    %228 = vector.broadcast %cst_71 : f32 to vector<8x64xf32>
    %229 = arith.addf %228, %227 : vector<8x64xf32>
    %230 = arith.divf %228, %229 : vector<8x64xf32>
    %231 = vector.extract_strided_slice %224 {offsets = [0, 64], sizes = [8, 32], strides = [1, 1]} : vector<8x128xf32> to vector<8x32xf32>
    %232 = math.tanh %231 : vector<8x32xf32>
    %233 = vector.extract_strided_slice %224 {offsets = [0, 96], sizes = [8, 32], strides = [1, 1]} : vector<8x128xf32> to vector<8x32xf32>
    %234 = arith.negf %233 : vector<8x32xf32>
    %235 = math.exp %234 : vector<8x32xf32>
    %cst_72 = arith.constant 1.000000e+00 : f32
    %236 = vector.broadcast %cst_72 : f32 to vector<8x32xf32>
    %237 = arith.addf %236, %235 : vector<8x32xf32>
    %238 = arith.divf %236, %237 : vector<8x32xf32>
    %239 = vector.extract_strided_slice %230 {offsets = [0, 32], sizes = [8, 32], strides = [1, 1]} : vector<8x64xf32> to vector<8x32xf32>
    %240 = arith.mulf %239, %204 : vector<8x32xf32>
    %241 = vector.extract_strided_slice %230 {offsets = [0, 0], sizes = [8, 32], strides = [1, 1]} : vector<8x64xf32> to vector<8x32xf32>
    %242 = arith.mulf %241, %232 : vector<8x32xf32>
    %243 = arith.addf %240, %242 : vector<8x32xf32>
    %244 = math.tanh %243 : vector<8x32xf32>
    %245 = arith.mulf %238, %244 : vector<8x32xf32>
    %246 = arith.index_cast %219 : i32 to index
    %c0_73 = arith.constant 0 : index
    %247 = vector.load %arg3[%246, %c0_73] : memref<64x1xf32, #tpu.memory_space<vmem>>, vector<8x1xf32>
    %248 = vector.broadcast %247 : vector<8x1xf32> to vector<8x32xf32>
    %249 = arith.mulf %245, %248 : vector<8x32xf32>
    %250 = arith.maximumf %211, %249 : vector<8x32xf32>
    %251 = arith.addf %212, %249 : vector<8x32xf32>
    %c6_i32 = arith.constant 6 : i32
    %c7_i32_74 = arith.constant 7 : i32
    %252 = arith.muli %arg0, %c7_i32_74 : i32
    %c2_i32_75 = arith.constant 2 : i32
    %253 = arith.muli %c2_i32_75, %arg0 : i32
    %c1_i32_76 = arith.constant 1 : i32
    %254 = arith.subi %c1_i32_76, %253 : i32
    %255 = arith.muli %254, %c6_i32 : i32
    %256 = arith.addi %252, %255 : i32
    %c8_i32_77 = arith.constant 8 : i32
    %257 = arith.muli %256, %c8_i32_77 : i32
    %258 = tpu.assume_multiple %257, 8 : i32
    %259 = arith.index_cast %258 : i32 to index
    %c0_78 = arith.constant 0 : index
    %260 = vector.load %arg8[%259, %c0_78] : memref<64x128xf32, #tpu.memory_space<vmem>>, vector<8x128xf32>
    %261 = arith.truncf %245 : vector<8x32xf32> to vector<8x32xbf16>
    %cst_79 = arith.constant dense<0.000000e+00> : vector<8x128xf32>
    %262 = tpu.matmul %261, %13, %cst_79 {dimension_numbers = #tpu.dot_dimension_numbers<[1], [0], [0], [1], [0, 0, 1, 1], [], []>} : vector<8x32xbf16>, vector<32x128xbf16>, vector<8x128xf32> -> vector<8x128xf32>
    %263 = arith.addf %260, %262 : vector<8x128xf32>
    %264 = vector.extract_strided_slice %263 {offsets = [0, 0], sizes = [8, 64], strides = [1, 1]} : vector<8x128xf32> to vector<8x64xf32>
    %265 = arith.negf %264 : vector<8x64xf32>
    %266 = math.exp %265 : vector<8x64xf32>
    %cst_80 = arith.constant 1.000000e+00 : f32
    %267 = vector.broadcast %cst_80 : f32 to vector<8x64xf32>
    %268 = arith.addf %267, %266 : vector<8x64xf32>
    %269 = arith.divf %267, %268 : vector<8x64xf32>
    %270 = vector.extract_strided_slice %263 {offsets = [0, 64], sizes = [8, 32], strides = [1, 1]} : vector<8x128xf32> to vector<8x32xf32>
    %271 = math.tanh %270 : vector<8x32xf32>
    %272 = vector.extract_strided_slice %263 {offsets = [0, 96], sizes = [8, 32], strides = [1, 1]} : vector<8x128xf32> to vector<8x32xf32>
    %273 = arith.negf %272 : vector<8x32xf32>
    %274 = math.exp %273 : vector<8x32xf32>
    %cst_81 = arith.constant 1.000000e+00 : f32
    %275 = vector.broadcast %cst_81 : f32 to vector<8x32xf32>
    %276 = arith.addf %275, %274 : vector<8x32xf32>
    %277 = arith.divf %275, %276 : vector<8x32xf32>
    %278 = vector.extract_strided_slice %269 {offsets = [0, 32], sizes = [8, 32], strides = [1, 1]} : vector<8x64xf32> to vector<8x32xf32>
    %279 = arith.mulf %278, %243 : vector<8x32xf32>
    %280 = vector.extract_strided_slice %269 {offsets = [0, 0], sizes = [8, 32], strides = [1, 1]} : vector<8x64xf32> to vector<8x32xf32>
    %281 = arith.mulf %280, %271 : vector<8x32xf32>
    %282 = arith.addf %279, %281 : vector<8x32xf32>
    %283 = math.tanh %282 : vector<8x32xf32>
    %284 = arith.mulf %277, %283 : vector<8x32xf32>
    %285 = arith.index_cast %258 : i32 to index
    %c0_82 = arith.constant 0 : index
    %286 = vector.load %arg3[%285, %c0_82] : memref<64x1xf32, #tpu.memory_space<vmem>>, vector<8x1xf32>
    %287 = vector.broadcast %286 : vector<8x1xf32> to vector<8x32xf32>
    %288 = arith.mulf %284, %287 : vector<8x32xf32>
    %289 = arith.maximumf %250, %288 : vector<8x32xf32>
    %290 = arith.addf %251, %288 : vector<8x32xf32>
    %c7_i32_83 = arith.constant 7 : i32
    %c7_i32_84 = arith.constant 7 : i32
    %291 = arith.muli %arg0, %c7_i32_84 : i32
    %c2_i32_85 = arith.constant 2 : i32
    %292 = arith.muli %c2_i32_85, %arg0 : i32
    %c1_i32_86 = arith.constant 1 : i32
    %293 = arith.subi %c1_i32_86, %292 : i32
    %294 = arith.muli %293, %c7_i32_83 : i32
    %295 = arith.addi %291, %294 : i32
    %c8_i32_87 = arith.constant 8 : i32
    %296 = arith.muli %295, %c8_i32_87 : i32
    %297 = tpu.assume_multiple %296, 8 : i32
    %298 = arith.index_cast %297 : i32 to index
    %c0_88 = arith.constant 0 : index
    %299 = vector.load %arg8[%298, %c0_88] : memref<64x128xf32, #tpu.memory_space<vmem>>, vector<8x128xf32>
    %300 = arith.truncf %284 : vector<8x32xf32> to vector<8x32xbf16>
    %cst_89 = arith.constant dense<0.000000e+00> : vector<8x128xf32>
    %301 = tpu.matmul %300, %13, %cst_89 {dimension_numbers = #tpu.dot_dimension_numbers<[1], [0], [0], [1], [0, 0, 1, 1], [], []>} : vector<8x32xbf16>, vector<32x128xbf16>, vector<8x128xf32> -> vector<8x128xf32>
    %302 = arith.addf %299, %301 : vector<8x128xf32>
    %303 = vector.extract_strided_slice %302 {offsets = [0, 0], sizes = [8, 64], strides = [1, 1]} : vector<8x128xf32> to vector<8x64xf32>
    %304 = arith.negf %303 : vector<8x64xf32>
    %305 = math.exp %304 : vector<8x64xf32>
    %cst_90 = arith.constant 1.000000e+00 : f32
    %306 = vector.broadcast %cst_90 : f32 to vector<8x64xf32>
    %307 = arith.addf %306, %305 : vector<8x64xf32>
    %308 = arith.divf %306, %307 : vector<8x64xf32>
    %309 = vector.extract_strided_slice %302 {offsets = [0, 64], sizes = [8, 32], strides = [1, 1]} : vector<8x128xf32> to vector<8x32xf32>
    %310 = math.tanh %309 : vector<8x32xf32>
    %311 = vector.extract_strided_slice %302 {offsets = [0, 96], sizes = [8, 32], strides = [1, 1]} : vector<8x128xf32> to vector<8x32xf32>
    %312 = arith.negf %311 : vector<8x32xf32>
    %313 = math.exp %312 : vector<8x32xf32>
    %cst_91 = arith.constant 1.000000e+00 : f32
    %314 = vector.broadcast %cst_91 : f32 to vector<8x32xf32>
    %315 = arith.addf %314, %313 : vector<8x32xf32>
    %316 = arith.divf %314, %315 : vector<8x32xf32>
    %317 = vector.extract_strided_slice %308 {offsets = [0, 32], sizes = [8, 32], strides = [1, 1]} : vector<8x64xf32> to vector<8x32xf32>
    %318 = arith.mulf %317, %282 : vector<8x32xf32>
    %319 = vector.extract_strided_slice %308 {offsets = [0, 0], sizes = [8, 32], strides = [1, 1]} : vector<8x64xf32> to vector<8x32xf32>
    %320 = arith.mulf %319, %310 : vector<8x32xf32>
    %321 = arith.addf %318, %320 : vector<8x32xf32>
    %322 = math.tanh %321 : vector<8x32xf32>
    %323 = arith.mulf %316, %322 : vector<8x32xf32>
    %324 = arith.index_cast %297 : i32 to index
    %c0_92 = arith.constant 0 : index
    %325 = vector.load %arg3[%324, %c0_92] : memref<64x1xf32, #tpu.memory_space<vmem>>, vector<8x1xf32>
    %326 = vector.broadcast %325 : vector<8x1xf32> to vector<8x32xf32>
    %327 = arith.mulf %323, %326 : vector<8x32xf32>
    %328 = arith.maximumf %289, %327 : vector<8x32xf32>
    %329 = arith.addf %290, %327 : vector<8x32xf32>
    %c8_i32_93 = arith.constant 8 : i32
    %c0_94 = arith.constant 0 : index
    %c0_95 = arith.constant 0 : index
    %330 = vector.load %arg9[%c0_94, %c0_95] : memref<8x32xf32, #tpu.memory_space<vmem>>, vector<8x32xf32>
    tpu.vector_store %arg9[%c0_94, %c0_95], %323 {strides = array<i32>} : memref<8x32xf32, #tpu.memory_space<vmem>>, vector<8x32xf32>,
    %c0_96 = arith.constant 0 : index
    %c0_97 = arith.constant 0 : index
    %331 = vector.load %arg10[%c0_96, %c0_97] : memref<8x32xf32, #tpu.memory_space<vmem>>, vector<8x32xf32>
    tpu.vector_store %arg10[%c0_96, %c0_97], %321 {strides = array<i32>} : memref<8x32xf32, #tpu.memory_space<vmem>>, vector<8x32xf32>,
    %c0_98 = arith.constant 0 : index
    %c0_99 = arith.constant 0 : index
    %332 = vector.load %arg11[%c0_98, %c0_99] : memref<8x32xf32, #tpu.memory_space<vmem>>, vector<8x32xf32>
    tpu.vector_store %arg11[%c0_98, %c0_99], %328 {strides = array<i32>} : memref<8x32xf32, #tpu.memory_space<vmem>>, vector<8x32xf32>,
    %c0_100 = arith.constant 0 : index
    %c0_101 = arith.constant 0 : index
    %333 = vector.load %arg12[%c0_100, %c0_101] : memref<8x32xf32, #tpu.memory_space<vmem>>, vector<8x32xf32>
    tpu.vector_store %arg12[%c0_100, %c0_101], %329 {strides = array<i32>} : memref<8x32xf32, #tpu.memory_space<vmem>>, vector<8x32xf32>,
    %c0_i32_102 = arith.constant 0 : i32
    %334 = arith.cmpi eq, %arg1, %c0_i32_102 : i32
    %335 = arith.extui %334 : i1 to i32
    %c0_i32_103 = arith.constant 0 : i32
    %336 = arith.cmpi ne, %335, %c0_i32_103 : i32
    scf.if %336 {
      %cst_104 = arith.constant 1.250000e-01 : f32
      %337 = vector.broadcast %cst_104 : f32 to vector<8x32xf32>
      %338 = arith.mulf %329, %337 : vector<8x32xf32>
      %339 = tpu.concatenate %328, %338 in 1 : vector<8x32xf32>, vector<8x32xf32> -> vector<8x64xf32>
      %c0_105 = arith.constant 0 : index
      %c0_106 = arith.constant 0 : index
      %c0_107 = arith.constant 0 : index
      %340 = vector.load %arg7[%c0_105, %c0_106, %c0_107] : memref<1x8x64xf32, #tpu.memory_space<vmem>>, vector<1x8x64xf32>
      %341 = vector.shape_cast %340 : vector<1x8x64xf32> to vector<8x64xf32>
      %342 = vector.shape_cast %339 : vector<8x64xf32> to vector<1x8x64xf32>
      tpu.vector_store %arg7[%c0_105, %c0_106, %c0_107], %342 {strides = array<i32>} : memref<1x8x64xf32, #tpu.memory_space<vmem>>, vector<1x8x64xf32>,
    } else {
    }
    return
  }
  func.func @transform_0(%arg0: i32, %arg1: i32) -> (i32, i32) {
    %c1_i32 = arith.constant 1 : i32
    %0 = arith.subi %c1_i32, %arg0 : i32
    %1 = arith.muli %0, %arg1 : i32
    %c0_i32 = arith.constant 0 : i32
    %2 = arith.subi %c0_i32, %arg1 : i32
    %3 = arith.muli %arg0, %2 : i32
    %4 = arith.addi %1, %3 : i32
    %c0_i32_0 = arith.constant 0 : i32
    %c0_i32_1 = arith.constant 0 : i32
    return %4, %c0_i32_0 : i32, i32
  }
  func.func @transform_1(%arg0: i32, %arg1: i32) -> (i32, i32) {
    %c1_i32 = arith.constant 1 : i32
    %0 = arith.subi %c1_i32, %arg0 : i32
    %1 = arith.muli %0, %arg1 : i32
    %c0_i32 = arith.constant 0 : i32
    %2 = arith.subi %c0_i32, %arg1 : i32
    %3 = arith.muli %arg0, %2 : i32
    %4 = arith.addi %1, %3 : i32
    %c0_i32_0 = arith.constant 0 : i32
    %c0_i32_1 = arith.constant 0 : i32
    return %4, %c0_i32_0 : i32, i32
  }
  func.func @transform_2(%arg0: i32, %arg1: i32) -> (i32, i32, i32) {
    %c0_i32 = arith.constant 0 : i32
    %c0_i32_0 = arith.constant 0 : i32
    %c0_i32_1 = arith.constant 0 : i32
    return %arg0, %c0_i32, %c0_i32_0 : i32, i32, i32
  }
  func.func @transform_3(%arg0: i32, %arg1: i32) -> (i32, i32, i32) {
    %c0_i32 = arith.constant 0 : i32
    %c0_i32_0 = arith.constant 0 : i32
    %c0_i32_1 = arith.constant 0 : i32
    return %arg0, %c0_i32, %c0_i32_0 : i32, i32, i32
  }
  func.func @transform_4(%arg0: i32, %arg1: i32) -> (i32, i32, i32) {
    %c0_i32 = arith.constant 0 : i32
    %c0_i32_0 = arith.constant 0 : i32
    %c0_i32_1 = arith.constant 0 : i32
    return %arg0, %c0_i32, %c0_i32_0 : i32, i32, i32
  }
  func.func @transform_5(%arg0: i32, %arg1: i32) -> (i32, i32, i32) {
    %c0_i32 = arith.constant 0 : i32
    %c0_i32_0 = arith.constant 0 : i32
    %c0_i32_1 = arith.constant 0 : i32
    return %arg0, %c0_i32, %c0_i32_0 : i32, i32, i32
  }
}

</mosaic_0001>

<llo_original>
// kernel: tpu_custom_call.1
$region0: #{tpu_custom_call.1}
  #allocation0 [shape = 'u32[]', space=smem, size = 0x4, offset = 0x4, fixed_abs, tag = 'smem constant byte address 0x4 - core index']
  #allocation1 [shape = 'u32[144,128]{1,0:T(1,128)}', space=vmem, size = 0x12000, scoped, tag = 'internal scratch']
  #allocation2 [shape = 'f32[64,128]{1,0:T(8,128)}', space=vmem, size = 0x8000, scoped, tag = 'scratch operand']
  #allocation3 [shape = 'f32[8,32]{1,0:T(8,128)}', space=vmem, size = 0x1000, scoped, tag = 'scratch operand']
  #allocation4 [shape = 'f32[8,32]{1,0:T(8,128)}', space=vmem, size = 0x1000, scoped, tag = 'scratch operand']
  #allocation5 [shape = 'f32[8,32]{1,0:T(8,128)}', space=vmem, size = 0x1000, scoped, tag = 'scratch operand']
  #allocation6 [shape = 'f32[8,32]{1,0:T(8,128)}', space=vmem, size = 0x1000, scoped, tag = 'scratch operand']
  %s0 = inlined_call_operand.vmem [shape: bf16[64,32], index: 0, kind: input, shape index: {}]
  %s1 = inlined_call_operand.vmem [shape: f32[64,1], index: 1, kind: input, shape index: {}]
  %s2 = inlined_call_operand.vmem [shape: bf16[2,32,128], index: 2, kind: input, shape index: {}]
  %s3 = inlined_call_operand.vmem [shape: bf16[2,32,128], index: 3, kind: input, shape index: {}]
  %s4 = inlined_call_operand.vmem [shape: f32[2,1,128], index: 4, kind: input, shape index: {}]
  %s5 = inlined_call_operand.hbm [shape: f32[2,8,64], index: 5, kind: output, shape index: {}]
  %s6 = sld [smem:[#allocation0]]
  $region61: #{tpu_custom_call.1} parent=0
    _
  %s8 = ssub.s32 1, %s6
  %s9 = scalar_select 0, %s8, %s6
  $region1: #{tpu_custom_call.1} parent=0
    #allocation7 [shape = 'u8[8192]{0}', space=vmem, size = 0x2000, scoped, tag = 'output window, operand 0']
    #allocation8 [shape = 's32[2]{0}', space=sflag, size = 0x8, scoped, tag = 'scoped memory for tpu_custom_call.1']
    %10 = vsyncpa [#allocation8], 0
    %s11 = scalar_lea.sflag [#allocation8], 1
    %12 = vsyncpa %s11, 0
    loop: start=0, step=1, limit=4
    $region2: #{tpu_custom_call.1} parent=1 // loop_pre_header
      _
    $region3: #{tpu_custom_call.1} parent=1 // loop_header
      %s14 = sphi 0, %s18
      %p15 = scmp.ge.s32.totalorder %s14, 4
      %s21 = sphi 0, %s33
      %s22 = sphi 0, %s29
      %s23 = sphi 0, %s21
      %s24 = sphi 0, %s22
      %s25 = sphi 0, %s23
      %s26 = sphi 0, %s24
      %s46 = sphi 0, %s48
      %s49 = sphi 0, %s46
      %s50 = sphi 0, %s49
      %s66 = sphi 0, %s50
      %s82 = sphi 0, %s84
      %s85 = sphi 0, %s82
      %s86 = sphi 0, %s85
      %s102 = sphi 0, %s86
      %s108 = sphi 0, %s110
      %s111 = sphi 0, %s108
      %s112 = sphi 0, %s111
      %s128 = sphi 0, %s112
      %s134 = sphi 0, %s136
      %s137 = sphi 0, %s134
      %s138 = sphi 0, %s137
      %s154 = sphi 0, %s138
      %s160 = sphi 0, %s162
      %s163 = sphi 0, %s160
      %s164 = sphi 0, %s163
      %s180 = sphi 0, %s164
      %s186 = sphi 0, %s188
      %s189 = sphi 0, %s186
      %s190 = sphi 0, %s189
      %s206 = sphi 0, %s190
    $region4: #{tpu_custom_call.1} parent=1 // loop_header_branch
      %17 = sbr.rel (%p15) target = $region8
    $region5: #{tpu_custom_call.1} parent=1 // loop_body
      %s19 = ssub.s32 %s14, 1
      %s20 = ssub.s32 %s14, 2
      %s27 = sadd.s32 1, %s22
      %p28 = scmp.ge.s32.totalorder %s27, 1
      %s29 = scalar_select %p28, 0, %s27
      %s30 = sadd.s32 1, %s21
      %s31 = scalar_select %p28, %s30, %s21
      %p32 = scmp.ge.s32.totalorder %s31, 2
      %s33 = scalar_select %p32, 0, %s31
      %s34 = ssub.s32 1, %s21
      %s35 = smul.u32 %s34, %s22
      %s36 = ssub.s32 0, %s22
      %s37 = smul.u32 %s21, %s36
      %s38 = sadd.s32 %s35, %s37
      %s39 = ssub.s32 1, %s33
      %s40 = smul.u32 %s39, %s29
      %s41 = ssub.s32 0, %s29
      %s42 = smul.u32 %s33, %s41
      %s43 = sadd.s32 %s40, %s42
      %s44 = ssub.s32 %s38, %s43
      %p45 = scmp.eq.s32.totalorder %s44, 0
      %s47 = sadd.s32 %s46, 1
      %s48 = scalar_select %p45, %s46, %s47
      %p51 = pneg %p45
      %p52 = scmp.eq.s32.totalorder %s14, 1
      %p53 = por %p51, %p52
      %p54 = scmp.ne.s32.totalorder %s46, %s49
      %p55 = scmp.eq.s32.totalorder %s14, 0
      %p56 = por %p54, %p55
      %p57 = scmp.ne.s32.totalorder %s46, %s49
      %p58 = scmp.eq.s32.totalorder %s19, 1
      %p59 = por %p57, %p58
      %p60 = scmp.ne.s32.totalorder %s49, %s50
      %p61 = scmp.eq.s32.totalorder %s19, 0
      %p62 = por %p60, %p61
      %p63 = scmp.ne.s32.totalorder %s49, %s50
      %p64 = scmp.eq.s32.totalorder %s20, 1
      %p65 = por %p63, %p64
      %p67 = scmp.ne.s32.totalorder %s50, %s66
      %p68 = scmp.eq.s32.totalorder %s20, 0
      %p69 = por %p67, %p68
      %s70 = ssub.s32 1, %s21
      %s71 = smul.u32 %s70, %s22
      %s72 = ssub.s32 0, %s22
      %s73 = smul.u32 %s21, %s72
      %s74 = sadd.s32 %s71, %s73
      %s75 = ssub.s32 1, %s33
      %s76 = smul.u32 %s75, %s29
      %s77 = ssub.s32 0, %s29
      %s78 = smul.u32 %s33, %s77
      %s79 = sadd.s32 %s76, %s78
      %s80 = ssub.s32 %s74, %s79
      %p81 = scmp.eq.s32.totalorder %s80, 0
      %s83 = sadd.s32 %s82, 1
      %s84 = scalar_select %p81, %s82, %s83
      %p87 = pneg %p81
      %p88 = scmp.eq.s32.totalorder %s14, 1
      %p89 = por %p87, %p88
      %p90 = scmp.ne.s32.totalorder %s82, %s85
      %p91 = scmp.eq.s32.totalorder %s14, 0
      %p92 = por %p90, %p91
      %p93 = scmp.ne.s32.totalorder %s82, %s85
      %p94 = scmp.eq.s32.totalorder %s19, 1
      %p95 = por %p93, %p94
      %p96 = scmp.ne.s32.totalorder %s85, %s86
      %p97 = scmp.eq.s32.totalorder %s19, 0
      %p98 = por %p96, %p97
      %p99 = scmp.ne.s32.totalorder %s85, %s86
      %p100 = scmp.eq.s32.totalorder %s20, 1
      %p101 = por %p99, %p100
      %p103 = scmp.ne.s32.totalorder %s86, %s102
      %p104 = scmp.eq.s32.totalorder %s20, 0
      %p105 = por %p103, %p104
      %s106 = ssub.s32 %s21, %s33
      %p107 = scmp.eq.s32.totalorder %s106, 0
      %s109 = sadd.s32 %s108, 1
      %s110 = scalar_select %p107, %s108, %s109
      %p113 = pneg %p107
      %p114 = scmp.eq.s32.totalorder %s14, 1
      %p115 = por %p113, %p114
      %p116 = scmp.ne.s32.totalorder %s108, %s111
      %p117 = scmp.eq.s32.totalorder %s14, 0
      %p118 = por %p116, %p117
      %p119 = scmp.ne.s32.totalorder %s108, %s111
      %p120 = scmp.eq.s32.totalorder %s19, 1
      %p121 = por %p119, %p120
      %p122 = scmp.ne.s32.totalorder %s111, %s112
      %p123 = scmp.eq.s32.totalorder %s19, 0
      %p124 = por %p122, %p123
      %p125 = scmp.ne.s32.totalorder %s111, %s112
      %p126 = scmp.eq.s32.totalorder %s20, 1
      %p127 = por %p125, %p126
      %p129 = scmp.ne.s32.totalorder %s112, %s128
      %p130 = scmp.eq.s32.totalorder %s20, 0
      %p131 = por %p129, %p130
      %s132 = ssub.s32 %s21, %s33
      %p133 = scmp.eq.s32.totalorder %s132, 0
      %s135 = sadd.s32 %s134, 1
      %s136 = scalar_select %p133, %s134, %s135
      %p139 = pneg %p133
      %p140 = scmp.eq.s32.totalorder %s14, 1
      %p141 = por %p139, %p140
      %p142 = scmp.ne.s32.totalorder %s134, %s137
      %p143 = scmp.eq.s32.totalorder %s14, 0
      %p144 = por %p142, %p143
      %p145 = scmp.ne.s32.totalorder %s134, %s137
      %p146 = scmp.eq.s32.totalorder %s19, 1
      %p147 = por %p145, %p146
      %p148 = scmp.ne.s32.totalorder %s137, %s138
      %p149 = scmp.eq.s32.totalorder %s19, 0
      %p150 = por %p148, %p149
      %p151 = scmp.ne.s32.totalorder %s137, %s138
      %p152 = scmp.eq.s32.totalorder %s20, 1
      %p153 = por %p151, %p152
      %p155 = scmp.ne.s32.totalorder %s138, %s154
      %p156 = scmp.eq.s32.totalorder %s20, 0
      %p157 = por %p155, %p156
      %s158 = ssub.s32 %s21, %s33
      %p159 = scmp.eq.s32.totalorder %s158, 0
      %s161 = sadd.s32 %s160, 1
      %s162 = scalar_select %p159, %s160, %s161
      %p165 = pneg %p159
      %p166 = scmp.eq.s32.totalorder %s14, 1
      %p167 = por %p165, %p166
      %p168 = scmp.ne.s32.totalorder %s160, %s163
      %p169 = scmp.eq.s32.totalorder %s14, 0
      %p170 = por %p168, %p169
      %p171 = scmp.ne.s32.totalorder %s160, %s163
      %p172 = scmp.eq.s32.totalorder %s19, 1
      %p173 = por %p171, %p172
      %p174 = scmp.ne.s32.totalorder %s163, %s164
      %p175 = scmp.eq.s32.totalorder %s19, 0
      %p176 = por %p174, %p175
      %p177 = scmp.ne.s32.totalorder %s163, %s164
      %p178 = scmp.eq.s32.totalorder %s20, 1
      %p179 = por %p177, %p178
      %p181 = scmp.ne.s32.totalorder %s164, %s180
      %p182 = scmp.eq.s32.totalorder %s20, 0
      %p183 = por %p181, %p182
      %s184 = ssub.s32 %s21, %s33
      %p185 = scmp.eq.s32.totalorder %s184, 0
      %s187 = sadd.s32 %s186, 1
      %s188 = scalar_select %p185, %s186, %s187
      %p191 = pneg %p185
      %p192 = scmp.eq.s32.totalorder %s14, 1
      %p193 = por %p191, %p192
      %p194 = scmp.ne.s32.totalorder %s186, %s189
      %p195 = scmp.eq.s32.totalorder %s14, 0
      %p196 = por %p194, %p195
      %p197 = scmp.ne.s32.totalorder %s186, %s189
      %p198 = scmp.eq.s32.totalorder %s19, 1
      %p199 = por %p197, %p198
      %p200 = scmp.ne.s32.totalorder %s189, %s190
      %p201 = scmp.eq.s32.totalorder %s19, 0
      %p202 = por %p200, %p201
      %p203 = scmp.ne.s32.totalorder %s189, %s190
      %p204 = scmp.eq.s32.totalorder %s20, 1
      %p205 = por %p203, %p204
      %p207 = scmp.ne.s32.totalorder %s190, %s206
      %p208 = scmp.eq.s32.totalorder %s20, 0
      %p209 = por %p207, %p208
      %p210 = scmp.le.s32.totalorder 1, %s14
      %p211 = scmp.lt.s32.totalorder %s14, 3
      %p212 = pnand %p210, %p211
      %p213 = pneg %p212
      // Predicated region
      $region9: #{tpu_custom_call.1} parent=5 // pred_check
        _
      $region10: #{tpu_custom_call.1} parent=5 // pred_check_branch
        %215 = sbr.rel (%p212) target = $region12
      $region11: #{tpu_custom_call.1} parent=5 // pred_region
        %s216 = ssub.s32 %s14, 1
      $region12: #{tpu_custom_call.1} parent=5 // pred_fallthru
        _
      %p217 = scmp.lt.s32.totalorder %s14, 2
      // Predicated region
      $region13: #{tpu_custom_call.1} parent=5 // pred_check
        %p218 = pneg %p217
      $region14: #{tpu_custom_call.1} parent=5 // pred_check_branch
        %220 = sbr.rel (%p218) target = $region16
      $region15: #{tpu_custom_call.1} parent=5 // pred_region
        // Predicated region
        $region17: #{tpu_custom_call.1} parent=15 // pred_check
          %p221 = pneg %p56
        $region18: #{tpu_custom_call.1} parent=15 // pred_check_branch
          %223 = sbr.rel (%p221) target = $region20
        $region19: #{tpu_custom_call.1} parent=15 // pred_region
          %s224 = ssub.s32 1, %s21
          %s225 = smul.u32 %s224, %s22
          %s226 = ssub.s32 0, %s22
          %s227 = smul.u32 %s21, %s226
          %s228 = sadd.s32 %s225, %s227
          %s229 = smul.u32 8, %s228
          %p230 = scmp.lt.s32.totalorder %s229, 7
          %s231 = scalar_select %p230, %s229, 7
          %s232 = smul.addr %s231, 4
          %s233 = scalar_lea.vmem %s0, %s232
          %s234 = ssub.s32 1, %s21
          %s235 = smul.u32 %s234, %s22
          %s236 = ssub.s32 0, %s22
          %s237 = smul.u32 %s21, %s236
          %s238 = sadd.s32 %s235, %s237
          %s239 = smul.u32 8, %s238
        $region20: #{tpu_custom_call.1} parent=15 // pred_fallthru
          _
        // Predicated region
        $region21: #{tpu_custom_call.1} parent=15 // pred_check
          %p240 = pneg %p92
        $region22: #{tpu_custom_call.1} parent=15 // pred_check_branch
          %242 = sbr.rel (%p240) target = $region24
        $region23: #{tpu_custom_call.1} parent=15 // pred_region
          %s243 = ssub.s32 1, %s21
          %s244 = smul.u32 %s243, %s22
          %s245 = ssub.s32 0, %s22
          %s246 = smul.u32 %s21, %s245
          %s247 = sadd.s32 %s244, %s246
          %s248 = smul.u32 8, %s247
          %p249 = scmp.lt.s32.totalorder %s248, 7
          %s250 = scalar_select %p249, %s248, 7
          %s251 = smul.addr %s250, 8
          %s252 = scalar_lea.vmem %s1, %s251
          %s253 = ssub.s32 1, %s21
          %s254 = smul.u32 %s253, %s22
          %s255 = ssub.s32 0, %s22
          %s256 = smul.u32 %s21, %s255
          %s257 = sadd.s32 %s254, %s256
          %s258 = smul.u32 8, %s257
        $region24: #{tpu_custom_call.1} parent=15 // pred_fallthru
          _
        // Predicated region
        $region25: #{tpu_custom_call.1} parent=15 // pred_check
          %p259 = pneg %p118
        $region26: #{tpu_custom_call.1} parent=15 // pred_check_branch
          %261 = sbr.rel (%p259) target = $region28
        $region27: #{tpu_custom_call.1} parent=15 // pred_region
          %p262 = scmp.lt.s32.totalorder %s21, 1
          %s263 = scalar_select %p262, %s21, 1
          %s264 = smul.addr %s263, 4
          %s265 = smul.addr %s264, 4
          %s266 = scalar_lea.vmem %s2, %s265
        $region28: #{tpu_custom_call.1} parent=15 // pred_fallthru
          _
        // Predicated region
        $region29: #{tpu_custom_call.1} parent=15 // pred_check
          %p267 = pneg %p144
        $region30: #{tpu_custom_call.1} parent=15 // pred_check_branch
          %269 = sbr.rel (%p267) target = $region32
        $region31: #{tpu_custom_call.1} parent=15 // pred_region
          %p270 = scmp.lt.s32.totalorder %s21, 1
          %s271 = scalar_select %p270, %s21, 1
          %s272 = smul.addr %s271, 4
          %s273 = smul.addr %s272, 4
          %s274 = scalar_lea.vmem %s3, %s273
        $region32: #{tpu_custom_call.1} parent=15 // pred_fallthru
          _
        // Predicated region
        $region33: #{tpu_custom_call.1} parent=15 // pred_check
          %p275 = pneg %p170
        $region34: #{tpu_custom_call.1} parent=15 // pred_check_branch
          %277 = sbr.rel (%p275) target = $region36
        $region35: #{tpu_custom_call.1} parent=15 // pred_region
          %p278 = scmp.lt.s32.totalorder %s21, 1
          %s279 = scalar_select %p278, %s21, 1
          %s280 = scalar_lea.vmem %s4, %s279
        $region36: #{tpu_custom_call.1} parent=15 // pred_fallthru
          _
      $region16: #{tpu_custom_call.1} parent=5 // pred_fallthru
        _
      %p281 = scmp.le.s32.totalorder 1, %s14
      %p282 = scmp.lt.s32.totalorder %s14, 3
      %p283 = pnand %p281, %p282
      %p284 = pneg %p283
      // Predicated region
      $region37: #{tpu_custom_call.1} parent=5 // pred_check
        _
      $region38: #{tpu_custom_call.1} parent=5 // pred_check_branch
        %286 = sbr.rel (%p283) target = $region40
      $region39: #{tpu_custom_call.1} parent=5 // pred_region
        %s287 = ssub.s32 %s14, 1
        %s288 = ssub.s32 1, %s23
        %s289 = smul.u32 %s288, %s24
        %s290 = ssub.s32 0, %s24
        %s291 = smul.u32 %s23, %s290
        %s292 = sadd.s32 %s289, %s291
        %s293 = smul.u32 8, %s292
        %p294 = scmp.lt.s32.totalorder %s293, 7
        %s295 = scalar_select %p294, %s293, 7
        %s296 = smul.addr %s295, 4
        %s297 = scalar_lea.vmem %s0, %s296
        %p298 = pneg %p62
        %p299 = pneg %p59
        %s300 = ssub.s32 1, %s23
        %s301 = smul.u32 %s300, %s24
        %s302 = ssub.s32 0, %s24
        %s303 = smul.u32 %s23, %s302
        %s304 = sadd.s32 %s301, %s303
        %s305 = smul.u32 8, %s304
        %p306 = scmp.lt.s32.totalorder %s305, 7
        %s307 = scalar_select %p306, %s305, 7
        %s308 = smul.addr %s307, 8
        %s309 = scalar_lea.vmem %s1, %s308
        %p310 = pneg %p98
        %p311 = pneg %p95
        %p312 = scmp.lt.s32.totalorder %s23, 1
        %s313 = scalar_select %p312, %s23, 1
        %s314 = smul.addr %s313, 4
        %s315 = smul.addr %s314, 4
        %s316 = scalar_lea.vmem %s2, %s315
        %p317 = pneg %p124
        %p318 = pneg %p121
        %p319 = scmp.lt.s32.totalorder %s23, 1
        %s320 = scalar_select %p319, %s23, 1
        %s321 = smul.addr %s320, 4
        %s322 = smul.addr %s321, 4
        %s323 = scalar_lea.vmem %s3, %s322
        %p324 = pneg %p150
        %p325 = pneg %p147
        %p326 = scmp.lt.s32.totalorder %s23, 1
        %s327 = scalar_select %p326, %s23, 1
        %s328 = scalar_lea.vmem %s4, %s327
        %p329 = pneg %p176
        %p330 = pneg %p173
        %p331 = pneg %p202
        %p332 = pneg %p199
        %s333 = sand.u32 %s189, 1
        %s334 = scalar_lea.sflag [#allocation8], %s333
        %s335 = sand.u32 %s189, 1
        %s336 = smul.addr %s335, 8
        %s337 = scalar_lea.vmem [#allocation7], %s336
        %s338 = ssub.s32 1, %s23
        %s339 = smul.u32 %s338, %s24
        %s340 = ssub.s32 0, %s24
        %s341 = smul.u32 %s23, %s340
        %s342 = sadd.s32 %s339, %s341
        %s343 = smul.u32 8, %s342
        %p344 = scmp.lt.s32.totalorder %s343, 7
        %s345 = scalar_select %p344, %s343, 7
        %s346 = smul.addr %s345, 4
        %s347 = scalar_lea.vmem %s0, %s346
        %s348 = ssub.s32 1, %s23
        %s349 = smul.u32 %s348, %s24
        %s350 = ssub.s32 0, %s24
        %s351 = smul.u32 %s23, %s350
        %s352 = sadd.s32 %s349, %s351
        %s353 = smul.u32 8, %s352
        %s354 = ssub.s32 1, %s23
        %s355 = smul.u32 %s354, %s24
        %s356 = ssub.s32 0, %s24
        %s357 = smul.u32 %s23, %s356
        %s358 = sadd.s32 %s355, %s357
        %s359 = smul.u32 8, %s358
        %p360 = scmp.lt.s32.totalorder %s359, 7
        %s361 = scalar_select %p360, %s359, 7
        %s362 = smul.addr %s361, 8
        %s363 = scalar_lea.vmem %s1, %s362
        %s364 = ssub.s32 1, %s23
        %s365 = smul.u32 %s364, %s24
        %s366 = ssub.s32 0, %s24
        %s367 = smul.u32 %s23, %s366
        %s368 = sadd.s32 %s365, %s367
        %s369 = smul.u32 8, %s368
        %p370 = scmp.lt.s32.totalorder %s23, 1
        %s371 = scalar_select %p370, %s23, 1
        %s372 = smul.addr %s371, 4
        %s373 = smul.addr %s372, 4
        %s374 = scalar_lea.vmem %s2, %s373
        %p375 = scmp.lt.s32.totalorder %s23, 1
        %s376 = scalar_select %p375, %s23, 1
        %s377 = smul.addr %s376, 4
        %s378 = smul.addr %s377, 4
        %s379 = scalar_lea.vmem %s3, %s378
        %p380 = scmp.lt.s32.totalorder %s23, 1
        %s381 = scalar_select %p380, %s23, 1
        %s382 = scalar_lea.vmem %s4, %s381
        %v384 = vld [vmem:[%s347] sm:$0xf]
        %v385 = vld [vmem:[%s347 + $0x4] sm:$0xf]
        %v386 = vld [vmem:[%s347 + $0x8] sm:$0xf]
        %v387 = vld [vmem:[%s347 + $0xc] sm:$0xf]
        %v388 = vld [vmem:[%s347 + $0x10] sm:$0xf]
        %v389 = vld [vmem:[%s347 + $0x14] sm:$0xf]
        %v390 = vld [vmem:[%s347 + $0x18] sm:$0xf]
        %v391 = vld [vmem:[%s347 + $0x1c] sm:$0xf]
        %v392 = vld [vmem:[%s374] sm:$0xf]
        %v393 = vld [vmem:[%s374 + $0x4] sm:$0xf]
        %v394 = vld [vmem:[%s374 + $0x8] sm:$0xf]
        %v395 = vld [vmem:[%s374 + $0xc] sm:$0xf]
        %v396 = vld [vmem:[%s382] sm:$0x1]
        %v398 = vlaneseq
        %v399 = vshrl.u32 %v398, 7
        %v400 = vsub.s32 0, %v399
        %v401 = vrot.slane %v396, %v400
        %v411 = vunpack.c.l.b16 %v384
        %v412 = vunpack.c.l.b16 %v385
        %v413 = vunpack.c.l.b16 %v386
        %v414 = vunpack.c.l.b16 %v387
        %v415 = vunpack.c.l.b16 %v388
        %v416 = vunpack.c.l.b16 %v389
        %v417 = vunpack.c.l.b16 %v390
        %v418 = vunpack.c.l.b16 %v391
        %v419 = vpack.c.b16 %v412, %v411
        %v420 = vpack.c.b16 %v414, %v413
        %v421 = vpack.c.b16 %v416, %v415
        %v422 = vpack.c.b16 %v418, %v417
        %v427 = vunpack.c.l.b16 %v392
        %v428 = vunpack.c.l.b16 %v393
        %v429 = vunpack.c.l.b16 %v394
        %v430 = vunpack.c.l.b16 %v395
        %v431 = vpack.c.b16 %v428, %v427
        %v432 = vpack.c.b16 %v430, %v429
        %vm435 = vcmask 261120
        %v437 = vsel %vm435, %v419, 0
        %v440 = vsel %vm435, %v420, 0
        %v443 = vsel %vm435, %v421, 0
        %v446 = vsel %vm435, %v422, 0
        %448 = vmatprep.subr.bf16.mxu0 0
        %449 = vmatpush1.bf16.msra.mxu0 %v431
        %450 = vmatprep.subr.bf16.mxu0 0
        %451 = vmatpush1.bf16.msra.mxu0 %v432
        %452 = vmatprep.subr.bf16.mxu0 0
        %453 = vmatpush1.bf16.msra.mxu0 0
        %454 = vmatprep.subr.bf16.mxu0 0
        %455 = vmatpush1.bf16.msra.mxu0 0
        %456 = vmatprep.subr.bf16.mxu0 0
        %457 = vmatpush1.bf16.msra.mxu0 0
        %458 = vmatprep.subr.bf16.mxu0 0
        %459 = vmatpush1.bf16.msra.mxu0 0
        %460 = vmatprep.subr.bf16.mxu0 0
        %461 = vmatpush1.bf16.msra.mxu0 0
        %462 = vmatprep.subr.bf16.mxu0 0
        %463 = vmatpush1.bf16.msra.mxu0 0
        %464 = vmatprep.subr.bf16.mxu0 0
        %465 = vmatpush1.bf16.msra.mxu0 0
        %466 = vmatprep.subr.bf16.mxu0 0
        %467 = vmatpush1.bf16.msra.mxu0 0
        %468 = vmatprep.subr.bf16.mxu0 0
        %469 = vmatpush1.bf16.msra.mxu0 0
        %470 = vmatprep.subr.bf16.mxu0 0
        %471 = vmatpush1.bf16.msra.mxu0 0
        %472 = vmatprep.subr.bf16.mxu0 0
        %473 = vmatpush1.bf16.msra.mxu0 0
        %474 = vmatprep.subr.bf16.mxu0 0
        %475 = vmatpush1.bf16.msra.mxu0 0
        %476 = vmatprep.subr.bf16.mxu0 0
        %477 = vmatpush1.bf16.msra.mxu0 0
        %478 = vmatprep.subr.bf16.mxu0 0
        %479 = vmatpush1.bf16.msra.mxu0 0
        %480 = vmatprep.mubr.bf16.mxu0 0
        %481 = vmatmul.mubr.bf16.gmra.mrb[0].mxu0 %v437
        %v482 = vpop.f32.mrb[0].mxu0
        %v483 = vadd.f32 %v401, %v482
        %v484 = vpop.f32.mrb[0].mxu0
        %v485 = vpop.f32.mrb[0].mxu0
        %v486 = vadd.f32 %v401, %v485
        %v487 = vpop.f32.mrb[0].mxu0
        %488 = vmatprep.mubr.bf16.mxu0 0
        %489 = vmatmul.mubr.bf16.gmra.mrb[0].mxu0 %v440
        %v490 = vpop.f32.mrb[0].mxu0
        %v491 = vadd.f32 %v401, %v490
        %v492 = vpop.f32.mrb[0].mxu0
        %v493 = vpop.f32.mrb[0].mxu0
        %v494 = vadd.f32 %v401, %v493
        %v495 = vpop.f32.mrb[0].mxu0
        %496 = vmatprep.mubr.bf16.mxu0 0
        %497 = vmatmul.mubr.bf16.gmra.mrb[0].mxu0 %v443
        %v498 = vpop.f32.mrb[0].mxu0
        %v499 = vadd.f32 %v401, %v498
        %v500 = vpop.f32.mrb[0].mxu0
        %v501 = vpop.f32.mrb[0].mxu0
        %v502 = vadd.f32 %v401, %v501
        %v503 = vpop.f32.mrb[0].mxu0
        %504 = vmatprep.mubr.bf16.mxu0 0
        %505 = vmatmul.mubr.bf16.gmra.mrb[0].mxu0 %v446
        %v506 = vpop.f32.mrb[0].mxu0
        %v507 = vadd.f32 %v401, %v506
        %v508 = vpop.f32.mrb[0].mxu0
        %v509 = vpop.f32.mrb[0].mxu0
        %v510 = vadd.f32 %v401, %v509
        %v511 = vpop.f32.mrb[0].mxu0
        %512 = vdwg.mxu0
        %513 = vst [vmem:[#allocation2] sm:$0xff] %v483
        %514 = vst [vmem:[#allocation2 + $0x8] sm:$0xff] %v486
        %515 = vst [vmem:[#allocation2 + $0x10] sm:$0xff] %v491
        %516 = vst [vmem:[#allocation2 + $0x18] sm:$0xff] %v494
        %517 = vst [vmem:[#allocation2 + $0x20] sm:$0xff] %v499
        %518 = vst [vmem:[#allocation2 + $0x28] sm:$0xff] %v502
        %519 = vst [vmem:[#allocation2 + $0x30] sm:$0xff] %v507
        %520 = vst [vmem:[#allocation2 + $0x38] sm:$0xff] %v510
        %p521 = scmp.eq.s32.totalorder %s24, 0
        // Predicated region
        $region41: #{tpu_custom_call.1} parent=39 // pred_check
          %p522 = pneg %p521
        $region42: #{tpu_custom_call.1} parent=39 // pred_check_branch
          %524 = sbr.rel (%p522) target = $region44
        $region43: #{tpu_custom_call.1} parent=39 // pred_region
          %525 = vst.msk [vmem:[#allocation3] sm:$0xff] %vm435, 0.0
          %526 = vst.msk [vmem:[#allocation4] sm:$0xff] %vm435, 0.0
          %527 = vst.msk [vmem:[#allocation5] sm:$0xff] %vm435, -inf
          %528 = vst.msk [vmem:[#allocation6] sm:$0xff] %vm435, 0.0
        $region44: #{tpu_custom_call.1} parent=39 // pred_fallthru
          _
        %v529 = vld [vmem:[%s379] sm:$0xf]
        %v530 = vld [vmem:[%s379 + $0x4] sm:$0xf]
        %v531 = vld [vmem:[%s379 + $0x8] sm:$0xf]
        %v532 = vld [vmem:[%s379 + $0xc] sm:$0xf]
        %v533 = vld [vmem:[#allocation3] sm:$0xff]
        %v534 = vld [vmem:[#allocation4] sm:$0xff]
        %v535 = vld [vmem:[#allocation5] sm:$0xff]
        %v536 = vld [vmem:[#allocation6] sm:$0xff]
        %s537 = smul.u32 %s23, 56
        %s538 = scalar_lea.vmem [#allocation2], %s537
        %v539 = vld [vmem:[%s538] sm:$0xff]
        %v540 = vpack.c.bf16 %v533, %v533
        %v545 = vunpack.c.l.b16 %v529
        %v546 = vunpack.c.l.b16 %v530
        %v547 = vunpack.c.l.b16 %v531
        %v548 = vunpack.c.l.b16 %v532
        %v549 = vpack.c.b16 %v546, %v545
        %v550 = vpack.c.b16 %v548, %v547
        %v554 = vsel %vm435, %v540, 0
        %556 = vmatprep.subr.bf16.mxu0 0
        %557 = vmatpush1.bf16.msra.mxu0 %v549
        %558 = vmatprep.subr.bf16.mxu0 0
        %559 = vmatpush1.bf16.msra.mxu0 %v550
        %560 = vmatprep.subr.bf16.mxu0 0
        %561 = vmatpush1.bf16.msra.mxu0 0
        %562 = vmatprep.subr.bf16.mxu0 0
        %563 = vmatpush1.bf16.msra.mxu0 0
        %564 = vmatprep.subr.bf16.mxu0 0
        %565 = vmatpush1.bf16.msra.mxu0 0
        %566 = vmatprep.subr.bf16.mxu0 0
        %567 = vmatpush1.bf16.msra.mxu0 0
        %568 = vmatprep.subr.bf16.mxu0 0
        %569 = vmatpush1.bf16.msra.mxu0 0
        %570 = vmatprep.subr.bf16.mxu0 0
        %571 = vmatpush1.bf16.msra.mxu0 0
        %572 = vmatprep.subr.bf16.mxu0 0
        %573 = vmatpush1.bf16.msra.mxu0 0
        %574 = vmatprep.subr.bf16.mxu0 0
        %575 = vmatpush1.bf16.msra.mxu0 0
        %576 = vmatprep.subr.bf16.mxu0 0
        %577 = vmatpush1.bf16.msra.mxu0 0
        %578 = vmatprep.subr.bf16.mxu0 0
        %579 = vmatpush1.bf16.msra.mxu0 0
        %580 = vmatprep.subr.bf16.mxu0 0
        %581 = vmatpush1.bf16.msra.mxu0 0
        %582 = vmatprep.subr.bf16.mxu0 0
        %583 = vmatpush1.bf16.msra.mxu0 0
        %584 = vmatprep.subr.bf16.mxu0 0
        %585 = vmatpush1.bf16.msra.mxu0 0
        %586 = vmatprep.subr.bf16.mxu0 0
        %587 = vmatpush1.bf16.msra.mxu0 0
        %588 = vmatprep.mubr.bf16.mxu0 0
        %589 = vmatmul.mubr.bf16.gmra.mrb[0].mxu0 %v554
        %v590 = vpop.f32.mrb[0].mxu0
        %v591 = vadd.f32 0.0, %v590
        %v592 = vpop.f32.mrb[0].mxu0
        %v593 = vpop.f32.mrb[0].mxu0
        %v594 = vpop.f32.mrb[0].mxu0
        %595 = vdwg.mxu0
        %v596 = vadd.f32 %v539, %v591
        %v597 = vxor.u32 %v596, 2147483648
        %v598 = vmul.f32 %v597, 1.442695
        %v599 = vpow.pop %v598
        %v600 = vadd.f32 %v599, 1.0
        %v601 = vrcp.pop %v600
        %v602 = vmul.f32 1.0, %v601
        %v603 = vtanh.pop %v596
        %605 = vrot.lane.b32.xlu0 %v534, 32
        %v606 = vpop.permute.xlu0 %605
        %v608 = vmul.f32 %v602, %v606
        %610 = vrot.lane.b32.xlu0 %v603, 64
        %v611 = vpop.permute.xlu0 %610
        %v613 = vmul.f32 %v602, %v611
        %615 = vrot.lane.b32.xlu0 %v613, 32
        %v616 = vpop.permute.xlu0 %615
        %v618 = vadd.f32 %v608, %v616
        %v619 = vtanh.pop %v618
        %621 = vrot.lane.b32.xlu0 %v619, 64
        %v622 = vpop.permute.xlu0 %621
        %v624 = vmul.f32 %v602, %v622
        %s625 = scalar_lea.vmem %s363, %s537
        %v626 = vld [vmem:[%s625] sm:$0xff]
        %628 = vset.pattern.permute.xlu0 0
        %629 = vperm.xlu0 %628, %v626
        %v630 = vpop.permute.xlu0 %629
        %v632 = vmul.f32 %v624, %v630
        %634 = vrot.lane.b32.xlu0 %v632, 32
        %v635 = vpop.permute.xlu0 %634
        %v637 = vmax.f32 %v535, %v635
        %v638 = vadd.f32 %v536, %v635
        %s639 = smul.u32 %s23, 7
        %s640 = smul.u32 %s23, 2
        %s641 = ssub.s32 1, %s640
        %s642 = sadd.s32 %s639, %s641
        %s643 = smul.u32 %s642, 8
        %s644 = scalar_lea.vmem [#allocation2], %s643
        %v645 = vld [vmem:[%s644] sm:$0xff]
        %v646 = vpack.c.bf16 %v624, %v624
        %648 = vrot.lane.b32.xlu0 %v646, 32
        %v649 = vpop.permute.xlu0 %648
        %v651 = vsel %vm435, %v649, 0
        %653 = vmatprep.subr.bf16.mxu0 0
        %654 = vmatpush1.bf16.msra.mxu0 %v549
        %655 = vmatprep.subr.bf16.mxu0 0
        %656 = vmatpush1.bf16.msra.mxu0 %v550
        %657 = vmatprep.subr.bf16.mxu0 0
        %658 = vmatpush1.bf16.msra.mxu0 0
        %659 = vmatprep.subr.bf16.mxu0 0
        %660 = vmatpush1.bf16.msra.mxu0 0
        %661 = vmatprep.subr.bf16.mxu0 0
        %662 = vmatpush1.bf16.msra.mxu0 0
        %663 = vmatprep.subr.bf16.mxu0 0
        %664 = vmatpush1.bf16.msra.mxu0 0
        %665 = vmatprep.subr.bf16.mxu0 0
        %666 = vmatpush1.bf16.msra.mxu0 0
        %667 = vmatprep.subr.bf16.mxu0 0
        %668 = vmatpush1.bf16.msra.mxu0 0
        %669 = vmatprep.subr.bf16.mxu0 0
        %670 = vmatpush1.bf16.msra.mxu0 0
        %671 = vmatprep.subr.bf16.mxu0 0
        %672 = vmatpush1.bf16.msra.mxu0 0
        %673 = vmatprep.subr.bf16.mxu0 0
        %674 = vmatpush1.bf16.msra.mxu0 0
        %675 = vmatprep.subr.bf16.mxu0 0
        %676 = vmatpush1.bf16.msra.mxu0 0
        %677 = vmatprep.subr.bf16.mxu0 0
        %678 = vmatpush1.bf16.msra.mxu0 0
        %679 = vmatprep.subr.bf16.mxu0 0
        %680 = vmatpush1.bf16.msra.mxu0 0
        %681 = vmatprep.subr.bf16.mxu0 0
        %682 = vmatpush1.bf16.msra.mxu0 0
        %683 = vmatprep.subr.bf16.mxu0 0
        %684 = vmatpush1.bf16.msra.mxu0 0
        %685 = vmatprep.mubr.bf16.mxu0 0
        %686 = vmatmul.mubr.bf16.gmra.mrb[0].mxu0 %v651
        %v687 = vpop.f32.mrb[0].mxu0
        %v688 = vadd.f32 0.0, %v687
        %v689 = vpop.f32.mrb[0].mxu0
        %v690 = vpop.f32.mrb[0].mxu0
        %v691 = vpop.f32.mrb[0].mxu0
        %692 = vdwg.mxu0
        %v693 = vadd.f32 %v645, %v688
        %v694 = vxor.u32 %v693, 2147483648
        %v695 = vmul.f32 %v694, 1.442695
        %v696 = vpow.pop %v695
        %v697 = vadd.f32 %v696, 1.0
        %v698 = vrcp.pop %v697
        %v699 = vmul.f32 1.0, %v698
        %v700 = vtanh.pop %v693
        %v701 = vmul.f32 %v699, %v618
        %703 = vrot.lane.b32.xlu0 %v700, 64
        %v704 = vpop.permute.xlu0 %703
        %v706 = vmul.f32 %v699, %v704
        %708 = vrot.lane.b32.xlu0 %v706, 32
        %v709 = vpop.permute.xlu0 %708
        %v711 = vadd.f32 %v701, %v709
        %v712 = vtanh.pop %v711
        %714 = vrot.lane.b32.xlu0 %v712, 64
        %v715 = vpop.permute.xlu0 %714
        %v717 = vmul.f32 %v699, %v715
        %s718 = scalar_lea.vmem %s363, %s643
        %v719 = vld [vmem:[%s718] sm:$0xff]
        %721 = vset.pattern.permute.xlu0 0
        %722 = vperm.xlu0 %721, %v719
        %v723 = vpop.permute.xlu0 %722
        %v725 = vmul.f32 %v717, %v723
        %727 = vrot.lane.b32.xlu0 %v725, 32
        %v728 = vpop.permute.xlu0 %727
        %v730 = vmax.f32 %v637, %v728
        %v731 = vadd.f32 %v638, %v728
        %s732 = smul.u32 %s641, 2
        %s733 = sadd.s32 %s639, %s732
        %s734 = smul.u32 %s733, 8
        %s735 = scalar_lea.vmem [#allocation2], %s734
        %v736 = vld [vmem:[%s735] sm:$0xff]
        %v737 = vpack.c.bf16 %v717, %v717
        %739 = vrot.lane.b32.xlu0 %v737, 32
        %v740 = vpop.permute.xlu0 %739
        %v742 = vsel %vm435, %v740, 0
        %744 = vmatprep.subr.bf16.mxu0 0
        %745 = vmatpush1.bf16.msra.mxu0 %v549
        %746 = vmatprep.subr.bf16.mxu0 0
        %747 = vmatpush1.bf16.msra.mxu0 %v550
        %748 = vmatprep.subr.bf16.mxu0 0
        %749 = vmatpush1.bf16.msra.mxu0 0
        %750 = vmatprep.subr.bf16.mxu0 0
        %751 = vmatpush1.bf16.msra.mxu0 0
        %752 = vmatprep.subr.bf16.mxu0 0
        %753 = vmatpush1.bf16.msra.mxu0 0
        %754 = vmatprep.subr.bf16.mxu0 0
        %755 = vmatpush1.bf16.msra.mxu0 0
        %756 = vmatprep.subr.bf16.mxu0 0
        %757 = vmatpush1.bf16.msra.mxu0 0
        %758 = vmatprep.subr.bf16.mxu0 0
        %759 = vmatpush1.bf16.msra.mxu0 0
        %760 = vmatprep.subr.bf16.mxu0 0
        %761 = vmatpush1.bf16.msra.mxu0 0
        %762 = vmatprep.subr.bf16.mxu0 0
        %763 = vmatpush1.bf16.msra.mxu0 0
        %764 = vmatprep.subr.bf16.mxu0 0
        %765 = vmatpush1.bf16.msra.mxu0 0
        %766 = vmatprep.subr.bf16.mxu0 0
        %767 = vmatpush1.bf16.msra.mxu0 0
        %768 = vmatprep.subr.bf16.mxu0 0
        %769 = vmatpush1.bf16.msra.mxu0 0
        %770 = vmatprep.subr.bf16.mxu0 0
        %771 = vmatpush1.bf16.msra.mxu0 0
        %772 = vmatprep.subr.bf16.mxu0 0
        %773 = vmatpush1.bf16.msra.mxu0 0
        %774 = vmatprep.subr.bf16.mxu0 0
        %775 = vmatpush1.bf16.msra.mxu0 0
        %776 = vmatprep.mubr.bf16.mxu0 0
        %777 = vmatmul.mubr.bf16.gmra.mrb[0].mxu0 %v742
        %v778 = vpop.f32.mrb[0].mxu0
        %v779 = vadd.f32 0.0, %v778
        %v780 = vpop.f32.mrb[0].mxu0
        %v781 = vpop.f32.mrb[0].mxu0
        %v782 = vpop.f32.mrb[0].mxu0
        %783 = vdwg.mxu0
        %v784 = vadd.f32 %v736, %v779
        %v785 = vxor.u32 %v784, 2147483648
        %v786 = vmul.f32 %v785, 1.442695
        %v787 = vpow.pop %v786
        %v788 = vadd.f32 %v787, 1.0
        %v789 = vrcp.pop %v788
        %v790 = vmul.f32 1.0, %v789
        %v791 = vtanh.pop %v784
        %v792 = vmul.f32 %v790, %v711
        %794 = vrot.lane.b32.xlu0 %v791, 64
        %v795 = vpop.permute.xlu0 %794
        %v797 = vmul.f32 %v790, %v795
        %799 = vrot.lane.b32.xlu0 %v797, 32
        %v800 = vpop.permute.xlu0 %799
        %v802 = vadd.f32 %v792, %v800
        %v803 = vtanh.pop %v802
        %805 = vrot.lane.b32.xlu0 %v803, 64
        %v806 = vpop.permute.xlu0 %805
        %v808 = vmul.f32 %v790, %v806
        %s809 = scalar_lea.vmem %s363, %s734
        %v810 = vld [vmem:[%s809] sm:$0xff]
        %812 = vset.pattern.permute.xlu0 0
        %813 = vperm.xlu0 %812, %v810
        %v814 = vpop.permute.xlu0 %813
        %v816 = vmul.f32 %v808, %v814
        %818 = vrot.lane.b32.xlu0 %v816, 32
        %v819 = vpop.permute.xlu0 %818
        %v821 = vmax.f32 %v730, %v819
        %v822 = vadd.f32 %v731, %v819
        %s823 = smul.u32 %s641, 3
        %s824 = sadd.s32 %s639, %s823
        %s825 = smul.u32 %s824, 8
        %s826 = scalar_lea.vmem [#allocation2], %s825
        %v827 = vld [vmem:[%s826] sm:$0xff]
        %v828 = vpack.c.bf16 %v808, %v808
        %830 = vrot.lane.b32.xlu0 %v828, 32
        %v831 = vpop.permute.xlu0 %830
        %v833 = vsel %vm435, %v831, 0
        %835 = vmatprep.subr.bf16.mxu0 0
        %836 = vmatpush1.bf16.msra.mxu0 %v549
        %837 = vmatprep.subr.bf16.mxu0 0
        %838 = vmatpush1.bf16.msra.mxu0 %v550
        %839 = vmatprep.subr.bf16.mxu0 0
        %840 = vmatpush1.bf16.msra.mxu0 0
        %841 = vmatprep.subr.bf16.mxu0 0
        %842 = vmatpush1.bf16.msra.mxu0 0
        %843 = vmatprep.subr.bf16.mxu0 0
        %844 = vmatpush1.bf16.msra.mxu0 0
        %845 = vmatprep.subr.bf16.mxu0 0
        %846 = vmatpush1.bf16.msra.mxu0 0
        %847 = vmatprep.subr.bf16.mxu0 0
        %848 = vmatpush1.bf16.msra.mxu0 0
        %849 = vmatprep.subr.bf16.mxu0 0
        %850 = vmatpush1.bf16.msra.mxu0 0
        %851 = vmatprep.subr.bf16.mxu0 0
        %852 = vmatpush1.bf16.msra.mxu0 0
        %853 = vmatprep.subr.bf16.mxu0 0
        %854 = vmatpush1.bf16.msra.mxu0 0
        %855 = vmatprep.subr.bf16.mxu0 0
        %856 = vmatpush1.bf16.msra.mxu0 0
        %857 = vmatprep.subr.bf16.mxu0 0
        %858 = vmatpush1.bf16.msra.mxu0 0
        %859 = vmatprep.subr.bf16.mxu0 0
        %860 = vmatpush1.bf16.msra.mxu0 0
        %861 = vmatprep.subr.bf16.mxu0 0
        %862 = vmatpush1.bf16.msra.mxu0 0
        %863 = vmatprep.subr.bf16.mxu0 0
        %864 = vmatpush1.bf16.msra.mxu0 0
        %865 = vmatprep.subr.bf16.mxu0 0
        %866 = vmatpush1.bf16.msra.mxu0 0
        %867 = vmatprep.mubr.bf16.mxu0 0
        %868 = vmatmul.mubr.bf16.gmra.mrb[0].mxu0 %v833
        %v869 = vpop.f32.mrb[0].mxu0
        %v870 = vadd.f32 0.0, %v869
        %v871 = vpop.f32.mrb[0].mxu0
        %v872 = vpop.f32.mrb[0].mxu0
        %v873 = vpop.f32.mrb[0].mxu0
        %874 = vdwg.mxu0
        %v875 = vadd.f32 %v827, %v870
        %v876 = vxor.u32 %v875, 2147483648
        %v877 = vmul.f32 %v876, 1.442695
        %v878 = vpow.pop %v877
        %v879 = vadd.f32 %v878, 1.0
        %v880 = vrcp.pop %v879
        %v881 = vmul.f32 1.0, %v880
        %v882 = vtanh.pop %v875
        %v883 = vmul.f32 %v881, %v802
        %885 = vrot.lane.b32.xlu0 %v882, 64
        %v886 = vpop.permute.xlu0 %885
        %v888 = vmul.f32 %v881, %v886
        %890 = vrot.lane.b32.xlu0 %v888, 32
        %v891 = vpop.permute.xlu0 %890
        %v893 = vadd.f32 %v883, %v891
        %v894 = vtanh.pop %v893
        %896 = vrot.lane.b32.xlu0 %v894, 64
        %v897 = vpop.permute.xlu0 %896
        %v899 = vmul.f32 %v881, %v897
        %s900 = scalar_lea.vmem %s363, %s825
        %v901 = vld [vmem:[%s900] sm:$0xff]
        %903 = vset.pattern.permute.xlu0 0
        %904 = vperm.xlu0 %903, %v901
        %v905 = vpop.permute.xlu0 %904
        %v907 = vmul.f32 %v899, %v905
        %909 = vrot.lane.b32.xlu0 %v907, 32
        %v910 = vpop.permute.xlu0 %909
        %v912 = vmax.f32 %v821, %v910
        %v913 = vadd.f32 %v822, %v910
        %s914 = smul.u32 %s641, 4
        %s915 = sadd.s32 %s639, %s914
        %s916 = smul.u32 %s915, 8
        %s917 = scalar_lea.vmem [#allocation2], %s916
        %v918 = vld [vmem:[%s917] sm:$0xff]
        %v919 = vpack.c.bf16 %v899, %v899
        %921 = vrot.lane.b32.xlu0 %v919, 32
        %v922 = vpop.permute.xlu0 %921
        %v924 = vsel %vm435, %v922, 0
        %926 = vmatprep.subr.bf16.mxu0 0
        %927 = vmatpush1.bf16.msra.mxu0 %v549
        %928 = vmatprep.subr.bf16.mxu0 0
        %929 = vmatpush1.bf16.msra.mxu0 %v550
        %930 = vmatprep.subr.bf16.mxu0 0
        %931 = vmatpush1.bf16.msra.mxu0 0
        %932 = vmatprep.subr.bf16.mxu0 0
        %933 = vmatpush1.bf16.msra.mxu0 0
        %934 = vmatprep.subr.bf16.mxu0 0
        %935 = vmatpush1.bf16.msra.mxu0 0
        %936 = vmatprep.subr.bf16.mxu0 0
        %937 = vmatpush1.bf16.msra.mxu0 0
        %938 = vmatprep.subr.bf16.mxu0 0
        %939 = vmatpush1.bf16.msra.mxu0 0
        %940 = vmatprep.subr.bf16.mxu0 0
        %941 = vmatpush1.bf16.msra.mxu0 0
        %942 = vmatprep.subr.bf16.mxu0 0
        %943 = vmatpush1.bf16.msra.mxu0 0
        %944 = vmatprep.subr.bf16.mxu0 0
        %945 = vmatpush1.bf16.msra.mxu0 0
        %946 = vmatprep.subr.bf16.mxu0 0
        %947 = vmatpush1.bf16.msra.mxu0 0
        %948 = vmatprep.subr.bf16.mxu0 0
        %949 = vmatpush1.bf16.msra.mxu0 0
        %950 = vmatprep.subr.bf16.mxu0 0
        %951 = vmatpush1.bf16.msra.mxu0 0
        %952 = vmatprep.subr.bf16.mxu0 0
        %953 = vmatpush1.bf16.msra.mxu0 0
        %954 = vmatprep.subr.bf16.mxu0 0
        %955 = vmatpush1.bf16.msra.mxu0 0
        %956 = vmatprep.subr.bf16.mxu0 0
        %957 = vmatpush1.bf16.msra.mxu0 0
        %958 = vmatprep.mubr.bf16.mxu0 0
        %959 = vmatmul.mubr.bf16.gmra.mrb[0].mxu0 %v924
        %v960 = vpop.f32.mrb[0].mxu0
        %v961 = vadd.f32 0.0, %v960
        %v962 = vpop.f32.mrb[0].mxu0
        %v963 = vpop.f32.mrb[0].mxu0
        %v964 = vpop.f32.mrb[0].mxu0
        %965 = vdwg.mxu0
        %v966 = vadd.f32 %v918, %v961
        %v967 = vxor.u32 %v966, 2147483648
        %v968 = vmul.f32 %v967, 1.442695
        %v969 = vpow.pop %v968
        %v970 = vadd.f32 %v969, 1.0
        %v971 = vrcp.pop %v970
        %v972 = vmul.f32 1.0, %v971
        %v973 = vtanh.pop %v966
        %v974 = vmul.f32 %v972, %v893
        %976 = vrot.lane.b32.xlu0 %v973, 64
        %v977 = vpop.permute.xlu0 %976
        %v979 = vmul.f32 %v972, %v977
        %981 = vrot.lane.b32.xlu0 %v979, 32
        %v982 = vpop.permute.xlu0 %981
        %v984 = vadd.f32 %v974, %v982
        %v985 = vtanh.pop %v984
        %987 = vrot.lane.b32.xlu0 %v985, 64
        %v988 = vpop.permute.xlu0 %987
        %v990 = vmul.f32 %v972, %v988
        %s991 = scalar_lea.vmem %s363, %s916
        %v992 = vld [vmem:[%s991] sm:$0xff]
        %994 = vset.pattern.permute.xlu0 0
        %995 = vperm.xlu0 %994, %v992
        %v996 = vpop.permute.xlu0 %995
        %v998 = vmul.f32 %v990, %v996
        %1000 = vrot.lane.b32.xlu0 %v998, 32
        %v1001 = vpop.permute.xlu0 %1000
        %v1003 = vmax.f32 %v912, %v1001
        %v1004 = vadd.f32 %v913, %v1001
        %s1005 = smul.u32 %s641, 5
        %s1006 = sadd.s32 %s639, %s1005
        %s1007 = smul.u32 %s1006, 8
        %s1008 = scalar_lea.vmem [#allocation2], %s1007
        %v1009 = vld [vmem:[%s1008] sm:$0xff]
        %v1010 = vpack.c.bf16 %v990, %v990
        %1012 = vrot.lane.b32.xlu0 %v1010, 32
        %v1013 = vpop.permute.xlu0 %1012
        %v1015 = vsel %vm435, %v1013, 0
        %1017 = vmatprep.subr.bf16.mxu0 0
        %1018 = vmatpush1.bf16.msra.mxu0 %v549
        %1019 = vmatprep.subr.bf16.mxu0 0
        %1020 = vmatpush1.bf16.msra.mxu0 %v550
        %1021 = vmatprep.subr.bf16.mxu0 0
        %1022 = vmatpush1.bf16.msra.mxu0 0
        %1023 = vmatprep.subr.bf16.mxu0 0
        %1024 = vmatpush1.bf16.msra.mxu0 0
        %1025 = vmatprep.subr.bf16.mxu0 0
        %1026 = vmatpush1.bf16.msra.mxu0 0
        %1027 = vmatprep.subr.bf16.mxu0 0
        %1028 = vmatpush1.bf16.msra.mxu0 0
        %1029 = vmatprep.subr.bf16.mxu0 0
        %1030 = vmatpush1.bf16.msra.mxu0 0
        %1031 = vmatprep.subr.bf16.mxu0 0
        %1032 = vmatpush1.bf16.msra.mxu0 0
        %1033 = vmatprep.subr.bf16.mxu0 0
        %1034 = vmatpush1.bf16.msra.mxu0 0
        %1035 = vmatprep.subr.bf16.mxu0 0
        %1036 = vmatpush1.bf16.msra.mxu0 0
        %1037 = vmatprep.subr.bf16.mxu0 0
        %1038 = vmatpush1.bf16.msra.mxu0 0
        %1039 = vmatprep.subr.bf16.mxu0 0
        %1040 = vmatpush1.bf16.msra.mxu0 0
        %1041 = vmatprep.subr.bf16.mxu0 0
        %1042 = vmatpush1.bf16.msra.mxu0 0
        %1043 = vmatprep.subr.bf16.mxu0 0
        %1044 = vmatpush1.bf16.msra.mxu0 0
        %1045 = vmatprep.subr.bf16.mxu0 0
        %1046 = vmatpush1.bf16.msra.mxu0 0
        %1047 = vmatprep.subr.bf16.mxu0 0
        %1048 = vmatpush1.bf16.msra.mxu0 0
        %1049 = vmatprep.mubr.bf16.mxu0 0
        %1050 = vmatmul.mubr.bf16.gmra.mrb[0].mxu0 %v1015
        %v1051 = vpop.f32.mrb[0].mxu0
        %v1052 = vadd.f32 0.0, %v1051
        %v1053 = vpop.f32.mrb[0].mxu0
        %v1054 = vpop.f32.mrb[0].mxu0
        %v1055 = vpop.f32.mrb[0].mxu0
        %1056 = vdwg.mxu0
        %v1057 = vadd.f32 %v1009, %v1052
        %v1058 = vxor.u32 %v1057, 2147483648
        %v1059 = vmul.f32 %v1058, 1.442695
        %v1060 = vpow.pop %v1059
        %v1061 = vadd.f32 %v1060, 1.0
        %v1062 = vrcp.pop %v1061
        %v1063 = vmul.f32 1.0, %v1062
        %v1064 = vtanh.pop %v1057
        %v1065 = vmul.f32 %v1063, %v984
        %1067 = vrot.lane.b32.xlu0 %v1064, 64
        %v1068 = vpop.permute.xlu0 %1067
        %v1070 = vmul.f32 %v1063, %v1068
        %1072 = vrot.lane.b32.xlu0 %v1070, 32
        %v1073 = vpop.permute.xlu0 %1072
        %v1075 = vadd.f32 %v1065, %v1073
        %v1076 = vtanh.pop %v1075
        %1078 = vrot.lane.b32.xlu0 %v1076, 64
        %v1079 = vpop.permute.xlu0 %1078
        %v1081 = vmul.f32 %v1063, %v1079
        %s1082 = scalar_lea.vmem %s363, %s1007
        %v1083 = vld [vmem:[%s1082] sm:$0xff]
        %1085 = vset.pattern.permute.xlu0 0
        %1086 = vperm.xlu0 %1085, %v1083
        %v1087 = vpop.permute.xlu0 %1086
        %v1089 = vmul.f32 %v1081, %v1087
        %1091 = vrot.lane.b32.xlu0 %v1089, 32
        %v1092 = vpop.permute.xlu0 %1091
        %v1094 = vmax.f32 %v1003, %v1092
        %v1095 = vadd.f32 %v1004, %v1092
        %s1096 = smul.u32 %s641, 6
        %s1097 = sadd.s32 %s639, %s1096
        %s1098 = smul.u32 %s1097, 8
        %s1099 = scalar_lea.vmem [#allocation2], %s1098
        %v1100 = vld [vmem:[%s1099] sm:$0xff]
        %v1101 = vpack.c.bf16 %v1081, %v1081
        %1103 = vrot.lane.b32.xlu0 %v1101, 32
        %v1104 = vpop.permute.xlu0 %1103
        %v1106 = vsel %vm435, %v1104, 0
        %1108 = vmatprep.subr.bf16.mxu0 0
        %1109 = vmatpush1.bf16.msra.mxu0 %v549
        %1110 = vmatprep.subr.bf16.mxu0 0
        %1111 = vmatpush1.bf16.msra.mxu0 %v550
        %1112 = vmatprep.subr.bf16.mxu0 0
        %1113 = vmatpush1.bf16.msra.mxu0 0
        %1114 = vmatprep.subr.bf16.mxu0 0
        %1115 = vmatpush1.bf16.msra.mxu0 0
        %1116 = vmatprep.subr.bf16.mxu0 0
        %1117 = vmatpush1.bf16.msra.mxu0 0
        %1118 = vmatprep.subr.bf16.mxu0 0
        %1119 = vmatpush1.bf16.msra.mxu0 0
        %1120 = vmatprep.subr.bf16.mxu0 0
        %1121 = vmatpush1.bf16.msra.mxu0 0
        %1122 = vmatprep.subr.bf16.mxu0 0
        %1123 = vmatpush1.bf16.msra.mxu0 0
        %1124 = vmatprep.subr.bf16.mxu0 0
        %1125 = vmatpush1.bf16.msra.mxu0 0
        %1126 = vmatprep.subr.bf16.mxu0 0
        %1127 = vmatpush1.bf16.msra.mxu0 0
        %1128 = vmatprep.subr.bf16.mxu0 0
        %1129 = vmatpush1.bf16.msra.mxu0 0
        %1130 = vmatprep.subr.bf16.mxu0 0
        %1131 = vmatpush1.bf16.msra.mxu0 0
        %1132 = vmatprep.subr.bf16.mxu0 0
        %1133 = vmatpush1.bf16.msra.mxu0 0
        %1134 = vmatprep.subr.bf16.mxu0 0
        %1135 = vmatpush1.bf16.msra.mxu0 0
        %1136 = vmatprep.subr.bf16.mxu0 0
        %1137 = vmatpush1.bf16.msra.mxu0 0
        %1138 = vmatprep.subr.bf16.mxu0 0
        %1139 = vmatpush1.bf16.msra.mxu0 0
        %1140 = vmatprep.mubr.bf16.mxu0 0
        %1141 = vmatmul.mubr.bf16.gmra.mrb[0].mxu0 %v1106
        %v1142 = vpop.f32.mrb[0].mxu0
        %v1143 = vadd.f32 0.0, %v1142
        %v1144 = vpop.f32.mrb[0].mxu0
        %v1145 = vpop.f32.mrb[0].mxu0
        %v1146 = vpop.f32.mrb[0].mxu0
        %1147 = vdwg.mxu0
        %v1148 = vadd.f32 %v1100, %v1143
        %v1149 = vxor.u32 %v1148, 2147483648
        %v1150 = vmul.f32 %v1149, 1.442695
        %v1151 = vpow.pop %v1150
        %v1152 = vadd.f32 %v1151, 1.0
        %v1153 = vrcp.pop %v1152
        %v1154 = vmul.f32 1.0, %v1153
        %v1155 = vtanh.pop %v1148
        %v1156 = vmul.f32 %v1154, %v1075
        %1158 = vrot.lane.b32.xlu0 %v1155, 64
        %v1159 = vpop.permute.xlu0 %1158
        %v1161 = vmul.f32 %v1154, %v1159
        %1163 = vrot.lane.b32.xlu0 %v1161, 32
        %v1164 = vpop.permute.xlu0 %1163
        %v1166 = vadd.f32 %v1156, %v1164
        %v1167 = vtanh.pop %v1166
        %1169 = vrot.lane.b32.xlu0 %v1167, 64
        %v1170 = vpop.permute.xlu0 %1169
        %v1172 = vmul.f32 %v1154, %v1170
        %s1173 = scalar_lea.vmem %s363, %s1098
        %v1174 = vld [vmem:[%s1173] sm:$0xff]
        %1176 = vset.pattern.permute.xlu0 0
        %1177 = vperm.xlu0 %1176, %v1174
        %v1178 = vpop.permute.xlu0 %1177
        %v1180 = vmul.f32 %v1172, %v1178
        %1182 = vrot.lane.b32.xlu0 %v1180, 32
        %v1183 = vpop.permute.xlu0 %1182
        %v1185 = vmax.f32 %v1094, %v1183
        %v1186 = vadd.f32 %v1095, %v1183
        %s1187 = smul.u32 %s641, 7
        %s1188 = sadd.s32 %s639, %s1187
        %s1189 = smul.u32 %s1188, 8
        %s1190 = scalar_lea.vmem [#allocation2], %s1189
        %v1191 = vld [vmem:[%s1190] sm:$0xff]
        %v1192 = vpack.c.bf16 %v1172, %v1172
        %1194 = vrot.lane.b32.xlu0 %v1192, 32
        %v1195 = vpop.permute.xlu0 %1194
        %v1197 = vsel %vm435, %v1195, 0
        %1199 = vmatprep.subr.bf16.mxu0 0
        %1200 = vmatpush1.bf16.msra.mxu0 %v549
        %1201 = vmatprep.subr.bf16.mxu0 0
        %1202 = vmatpush1.bf16.msra.mxu0 %v550
        %1203 = vmatprep.subr.bf16.mxu0 0
        %1204 = vmatpush1.bf16.msra.mxu0 0
        %1205 = vmatprep.subr.bf16.mxu0 0
        %1206 = vmatpush1.bf16.msra.mxu0 0
        %1207 = vmatprep.subr.bf16.mxu0 0
        %1208 = vmatpush1.bf16.msra.mxu0 0
        %1209 = vmatprep.subr.bf16.mxu0 0
        %1210 = vmatpush1.bf16.msra.mxu0 0
        %1211 = vmatprep.subr.bf16.mxu0 0
        %1212 = vmatpush1.bf16.msra.mxu0 0
        %1213 = vmatprep.subr.bf16.mxu0 0
        %1214 = vmatpush1.bf16.msra.mxu0 0
        %1215 = vmatprep.subr.bf16.mxu0 0
        %1216 = vmatpush1.bf16.msra.mxu0 0
        %1217 = vmatprep.subr.bf16.mxu0 0
        %1218 = vmatpush1.bf16.msra.mxu0 0
        %1219 = vmatprep.subr.bf16.mxu0 0
        %1220 = vmatpush1.bf16.msra.mxu0 0
        %1221 = vmatprep.subr.bf16.mxu0 0
        %1222 = vmatpush1.bf16.msra.mxu0 0
        %1223 = vmatprep.subr.bf16.mxu0 0
        %1224 = vmatpush1.bf16.msra.mxu0 0
        %1225 = vmatprep.subr.bf16.mxu0 0
        %1226 = vmatpush1.bf16.msra.mxu0 0
        %1227 = vmatprep.subr.bf16.mxu0 0
        %1228 = vmatpush1.bf16.msra.mxu0 0
        %1229 = vmatprep.subr.bf16.mxu0 0
        %1230 = vmatpush1.bf16.msra.mxu0 0
        %1231 = vmatprep.mubr.bf16.mxu0 0
        %1232 = vmatmul.mubr.bf16.gmra.mrb[0].mxu0 %v1197
        %v1233 = vpop.f32.mrb[0].mxu0
        %v1234 = vadd.f32 0.0, %v1233
        %v1235 = vpop.f32.mrb[0].mxu0
        %v1236 = vpop.f32.mrb[0].mxu0
        %v1237 = vpop.f32.mrb[0].mxu0
        %1238 = vdwg.mxu0
        %v1239 = vadd.f32 %v1191, %v1234
        %v1240 = vxor.u32 %v1239, 2147483648
        %v1241 = vmul.f32 %v1240, 1.442695
        %v1242 = vpow.pop %v1241
        %v1243 = vadd.f32 %v1242, 1.0
        %v1244 = vrcp.pop %v1243
        %v1245 = vmul.f32 1.0, %v1244
        %v1246 = vtanh.pop %v1239
        %v1247 = vmul.f32 %v1245, %v1166
        %1249 = vrot.lane.b32.xlu0 %v1246, 64
        %v1250 = vpop.permute.xlu0 %1249
        %v1252 = vmul.f32 %v1245, %v1250
        %1254 = vrot.lane.b32.xlu0 %v1252, 32
        %v1255 = vpop.permute.xlu0 %1254
        %v1257 = vadd.f32 %v1247, %v1255
        %v1258 = vtanh.pop %v1257
        %1260 = vrot.lane.b32.xlu0 %v1258, 64
        %v1261 = vpop.permute.xlu0 %1260
        %v1263 = vmul.f32 %v1245, %v1261
        %s1264 = scalar_lea.vmem %s363, %s1189
        %v1265 = vld [vmem:[%s1264] sm:$0xff]
        %1267 = vset.pattern.permute.xlu0 0
        %1268 = vperm.xlu0 %1267, %v1265
        %v1269 = vpop.permute.xlu0 %1268
        %v1271 = vmul.f32 %v1263, %v1269
        %1273 = vrot.lane.b32.xlu0 %v1271, 32
        %v1274 = vpop.permute.xlu0 %1273
        %v1276 = vmax.f32 %v1185, %v1274
        %v1277 = vadd.f32 %v1186, %v1274
        %1279 = vrot.lane.b32.xlu0 %v1263, 32
        %v1280 = vpop.permute.xlu0 %1279
        %1282 = vst.msk [vmem:[#allocation3] sm:$0xff] %vm435, %v1280
        %1284 = vrot.lane.b32.xlu0 %v1257, 96
        %v1285 = vpop.permute.xlu0 %1284
        %1287 = vst.msk [vmem:[#allocation4] sm:$0xff] %vm435, %v1285
        %1288 = vst.msk [vmem:[#allocation5] sm:$0xff] %vm435, %v1276
        %1289 = vst.msk [vmem:[#allocation6] sm:$0xff] %vm435, %v1277
        // Predicated region
        $region45: #{tpu_custom_call.1} parent=39 // pred_check
          %p1290 = pneg %p521
        $region46: #{tpu_custom_call.1} parent=39 // pred_check_branch
          %1292 = sbr.rel (%p1290) target = $region48
        $region47: #{tpu_custom_call.1} parent=39 // pred_region
          %v1293 = vmul.f32 %v1277, 0.125
          %1295 = vrot.lane.b32.xlu0 %v1293, 32
          %v1296 = vpop.permute.xlu0 %1295
          %v1298 = vsel %vm435, %v1276, %v1296
          %vm1299 = vcmask 523264
          %1300 = vst.msk [vmem:[%s337] sm:$0xff] %vm1299, %v1298
        $region48: #{tpu_custom_call.1} parent=39 // pred_fallthru
          _
        %s1301 = sand.u32 %s189, 1
        %s1302 = scalar_lea.sflag [#allocation8], %s1301
        %s1303 = sand.u32 %s189, 1
        %s1304 = smul.addr %s1303, 8
        %s1305 = scalar_lea.vmem [#allocation7], %s1304
        // Predicated region
        $region49: #{tpu_custom_call.1} parent=39 // pred_check
          %p1306 = pneg %p199
        $region50: #{tpu_custom_call.1} parent=39 // pred_check_branch
          %1308 = sbr.rel (%p1306) target = $region52
        $region51: #{tpu_custom_call.1} parent=39 // pred_region
          %s1310 = ssub.s32 128, 128
          %1311 = vsyncadd %s1302, %s1310
          %s1312 = smul.addr %s23, 128
          %s1313 = scalar_lea.hbm %s5, %s1312
          %s1315 = sshll.u32 %s1305, 4
          %s1316 = int_to_ptr.vmem [resolvable:$true] %s1315
          %1318 = dma.vmem_to_hbm [thread:$0]  %s1316, 128, %s1313, %s1302
        $region52: #{tpu_custom_call.1} parent=39 // pred_fallthru
          _
      $region40: #{tpu_custom_call.1} parent=5 // pred_fallthru
        _
      %p1319 = scmp.le.s32.totalorder 2, %s14
      // Predicated region
      $region53: #{tpu_custom_call.1} parent=5 // pred_check
        %p1320 = pneg %p1319
      $region54: #{tpu_custom_call.1} parent=5 // pred_check_branch
        %1322 = sbr.rel (%p1320) target = $region56
      $region55: #{tpu_custom_call.1} parent=5 // pred_region
        %s1323 = ssub.s32 %s14, 2
        // Predicated region
        $region57: #{tpu_custom_call.1} parent=55 // pred_check
          %p1324 = pneg %p205
        $region58: #{tpu_custom_call.1} parent=55 // pred_check_branch
          %1326 = sbr.rel (%p1324) target = $region60
        $region59: #{tpu_custom_call.1} parent=55 // pred_region
          %s1327 = sand.u32 %s190, 1
          %s1328 = scalar_lea.sflag [#allocation8], %s1327
          %s1329 = sand.u32 %s190, 1
          %s1330 = smul.addr %s1329, 8
          %s1331 = scalar_lea.vmem [#allocation7], %s1330
          %1332 = dma.done %s1328, 128
        $region60: #{tpu_custom_call.1} parent=55 // pred_fallthru
          _
      $region56: #{tpu_custom_call.1} parent=5 // pred_fallthru
        _
    $region6: #{tpu_custom_call.1} parent=1 // loop_footer
      %s18 = sadd.s32 1, %s14
    $region7: #{tpu_custom_call.1} parent=1 // loop_footer_branch
      %13 = sbr.rel target = $region3
    $region8: #{tpu_custom_call.1} parent=1 // loop_exit
      _
    %1333 = vsyncpa [#allocation8], 1
    %s1334 = scalar_lea.sflag [#allocation8], 1
    %1335 = vsyncpa %s1334, 1

</llo_original>
